<compile_context>
chip_gen: v7x
topology: tpu7x:2x2x1
jax: 0.10.0
libtpu: 0.0.40
codegen_flags: <defaults>
</compile_context>

<pallas_src>
import functools

import jax
import jax.numpy as jnp
from jax.experimental import pallas as pl
from jax.experimental.pallas import tpu as pltpu


def _round_up(x, m):
    return (x + m - 1) // m * m


def move_head_kernel(
    moves_ref, ar_ref, mask_ref, atype_ref, u_ref,
    wk1_ref, bk1_ref, wk2_ref, bk2_ref,
    wq1_ref, bq1_ref, wq2_ref, bq2_ref,
    wp1_ref, bp1_ref, wp2_ref, bp2_ref,
    logits_ref, policy_ref, index_ref, ar_out_ref,
    *, n_moves,
):
    f32 = jnp.float32
    bf16 = jnp.bfloat16

    # ---- query = query_fc(autoregressive_embedding); everything is (feat, TBt) ----
    ar = ar_ref[...]                                                      # (A, TBt) f32
    hq = jnp.dot(wq1_ref[...], ar.astype(bf16),
                 preferred_element_type=f32) + bq1_ref[...]
    hq = jnp.maximum(hq, 0.0)
    query = jnp.dot(wq2_ref[...], hq.astype(bf16),
                    preferred_element_type=f32) + bq2_ref[...]            # (K, TBt)

    # ---- keys_n = key_fc(moves_n); logits_n = <query, keys_n>; unrolled over N ----
    wk1 = wk1_ref[...]
    bk1 = bk1_ref[...]
    wk2 = wk2_ref[...]
    bk2 = bk2_ref[...]
    keys = []
    logit_rows = []
    for n in range(n_moves):
        m_n = moves_ref[n]                                                # (E, TBt) bf16
        h = jnp.maximum(jnp.dot(wk1, m_n, preferred_element_type=f32) + bk1, 0.0)
        k_n = jnp.dot(wk2, h.astype(bf16),
                      preferred_element_type=f32) + bk2                   # (K, TBt) f32
        keys.append(k_n)
        logit_rows.append(jnp.sum(query * k_n, axis=0, keepdims=True))    # (1, TBt)

    logits = jnp.concatenate(logit_rows, axis=0)                          # (N, TBt)
    logits_ref[...] = logits

    # ---- _legal_policy (masked softmax, R-NaD style), reductions over N axis ----
    legal = mask_ref[...] > 0.5                                           # (N, TBt)
    legal_f = legal.astype(f32)
    l_min = jnp.min(logits, axis=0, keepdims=True)
    lg = jnp.where(legal, logits, l_min)
    lg = lg - jnp.max(lg, axis=0, keepdims=True)
    lg = lg * legal_f
    exp_l = jnp.where(legal, jnp.exp(lg), 0.0)
    denom = jnp.sum(exp_l, axis=0, keepdims=True)                         # (1, TBt)
    policy = exp_l * pl.reciprocal(denom, approx=True)
    policy_ref[...] = policy

    # ---- torch.multinomial(policy, 1): inverse-CDF via unrolled prefix sum ----
    u = u_ref[...]                                                        # (1, TBt)
    cdf = jnp.zeros_like(u)
    idx = jnp.zeros(u.shape, jnp.int32)
    for n in range(n_moves):
        cdf = cdf + policy[n:n + 1, :]
        idx = idx + (cdf < u).astype(jnp.int32)
    idx = jnp.minimum(idx, n_moves - 1)
    index_ref[...] = idx

    # ---- gather_along_rows(keys, idx) via one-hot accumulation over the N slabs ----
    emb = jnp.zeros_like(keys[0])                                         # (K, TBt)
    for n in range(n_moves):
        sel = (idx == n).astype(f32)                                      # (1, TBt)
        emb = emb + sel * keys[n]

    # ---- proj_move + residual gated by (action_type_index == 0) ----
    hp = jnp.maximum(
        jnp.dot(wp1_ref[...], emb.astype(bf16),
                preferred_element_type=f32) + bp1_ref[...], 0.0)
    proj = jnp.dot(wp2_ref[...], hp.astype(bf16),
                   preferred_element_type=f32) + bp2_ref[...]             # (A, TBt)

    valid = (atype_ref[...] == 0).astype(f32)                             # (1, TBt)
    ar_out_ref[...] = ar + valid * proj


def init_params(key, entity_dim, ar_dim, query_hidden_dim, key_dim):
    """PyTorch-Linear-style init; weights stored (out, in), biases (out, 1)."""
    def linear(k, fan_in, fan_out):
        kw, kb = jax.random.split(k)
        lim = 1.0 / jnp.sqrt(jnp.float32(fan_in))
        w = jax.random.uniform(kw, (fan_out, fan_in), jnp.float32, -lim, lim)
        b = jax.random.uniform(kb, (fan_out, 1), jnp.float32, -lim, lim)
        return w, b

    ks = jax.random.split(key, 6)
    p = {}
    p["wk1"], p["bk1"] = linear(ks[0], entity_dim, entity_dim)
    p["wk2"], p["bk2"] = linear(ks[1], entity_dim, key_dim)
    p["wq1"], p["bq1"] = linear(ks[2], ar_dim, query_hidden_dim)
    p["wq2"], p["bq2"] = linear(ks[3], query_hidden_dim, key_dim)
    p["wp1"], p["bp1"] = linear(ks[4], key_dim, entity_dim)
    p["wp2"], p["bp2"] = linear(ks[5], entity_dim, ar_dim)
    return p


def move_head_forward(params, action_type_index, autoregressive_embedding,
                      moves, move_mask, sample_key, *, tb_tile=512):
    T, B, A = autoregressive_embedding.shape
    _, _, N, E = moves.shape
    TB = T * B

    # Lane tile over the T*B axis: multiple of 128, capped at tb_tile.
    tile = min(_round_up(TB, 128), _round_up(tb_tile, 128))
    TB_pad = _round_up(TB, tile)
    grid = TB_pad // tile
    pad = TB_pad - TB

    # Lane-major layouts: feature dims on sublanes, T*B on lanes (layout plumbing
    # done by XLA outside the kernel).
    moves_t = moves.astype(jnp.float32).reshape(TB, N, E).transpose(1, 2, 0)   # (N, E, TB)
    ar_t = autoregressive_embedding.astype(jnp.float32).reshape(TB, A).T       # (A, TB)
    mask2 = move_mask.reshape(TB, N)
    # torch: `move_mask[move_mask.sum() == 0] = True` — global all-false fallback.
    mask2 = jnp.where(mask2.sum() == 0, jnp.ones_like(mask2), mask2)
    mask_t = mask2.astype(jnp.float32).T                                       # (N, TB)
    atype_t = action_type_index.reshape(1, TB).astype(jnp.int32)
    # torch.multinomial's internal RNG replaced by inverse-CDF on jax.random uniforms.
    u_t = jax.random.uniform(sample_key, (1, TB), dtype=jnp.float32)

    if pad:
        moves_t = jnp.pad(moves_t, ((0, 0), (0, 0), (0, pad)))
        ar_t = jnp.pad(ar_t, ((0, 0), (0, pad)))
        mask_t = jnp.pad(mask_t, ((0, 0), (0, pad)), constant_values=1.0)
        atype_t = jnp.pad(atype_t, ((0, 0), (0, pad)), constant_values=1)
        u_t = jnp.pad(u_t, ((0, 0), (0, pad)), constant_values=0.5)

    moves_b = moves_t.astype(jnp.bfloat16)   # dominant HBM traffic in bf16

    wnames = ["wk1", "wk2", "wq1", "wq2", "wp1", "wp2"]
    bnames = ["bk1", "bk2", "bq1", "bq2", "bp1", "bp2"]
    w_b = {k: params[k].astype(jnp.bfloat16) for k in wnames}
    b_f = {k: params[k].astype(jnp.float32) for k in bnames}

    def data_spec(shape):
        block = tuple(shape[:-1]) + (tile,)
        if len(shape) == 3:
            return pl.BlockSpec(block, lambda i: (0, 0, i))
        return pl.BlockSpec(block, lambda i: (0, i))

    def resident_spec(shape):
        return pl.BlockSpec(tuple(shape), lambda i: (0, 0))

    in_specs = [
        data_spec(moves_b.shape),    # moves (N, E, TB_pad)
        data_spec(ar_t.shape),       # ar    (A, TB_pad)
        data_spec(mask_t.shape),     # mask  (N, TB_pad)
        data_spec(atype_t.shape),    # atype (1, TB_pad)
        data_spec(u_t.shape),        # u     (1, TB_pad)
    ]
    weight_args = []
    for wn, bn in zip(wnames, bnames):
        weight_args += [w_b[wn], b_f[bn]]
        in_specs += [resident_spec(w_b[wn].shape), resident_spec(b_f[bn].shape)]

    out_shapes = (
        jax.ShapeDtypeStruct((N, TB_pad), jnp.float32),   # move_logits^T
        jax.ShapeDtypeStruct((N, TB_pad), jnp.float32),   # move_policy^T
        jax.ShapeDtypeStruct((1, TB_pad), jnp.int32),     # move_index^T
        jax.ShapeDtypeStruct((A, TB_pad), jnp.float32),   # updated ar embedding^T
    )
    out_specs = (
        data_spec((N, TB_pad)),
        data_spec((N, TB_pad)),
        data_spec((1, TB_pad)),
        data_spec((A, TB_pad)),
    )

    kernel = functools.partial(move_head_kernel, n_moves=N)
    logits_t, policy_t, idx_t, ar_out_t = pl.pallas_call(
        kernel,
        grid=(grid,),
        in_specs=in_specs,
        out_specs=out_specs,
        out_shape=out_shapes,
        input_output_aliases={1: 3},   # reuse the ar input buffer for the updated embedding
        compiler_params=pltpu.CompilerParams(
            dimension_semantics=("parallel",)),
    )(moves_b, ar_t, mask_t, atype_t, u_t, *weight_args)

    move_logits = logits_t[:, :TB].T.reshape(T, B, N)
    move_policy = policy_t[:, :TB].T.reshape(T, B, N)
    move_index = idx_t[:, :TB].T.reshape(T, B, 1)
    new_ar = ar_out_t[:, :TB].T.reshape(T, B, A)
    return move_logits, move_policy, move_index, new_ar


if __name__ == "__main__":
    # Small config consistent with the module's __init__:
    #   entity_embedding_dim=32, key_dim=16, query_hidden_dim=32,
    #   autoregressive_embedding_dim=32, T=2, B=4, num_moves=4.
    T, B, N = 2, 4, 4
    ENTITY, AR, QHID, KEY = 32, 32, 32, 16

    root = jax.random.PRNGKey(0)
    kp, km, ka, kmask, kat, ksamp = jax.random.split(root, 6)

    params = init_params(kp, ENTITY, AR, QHID, KEY)
    moves = jax.random.normal(km, (T, B, N, ENTITY), jnp.float32)
    autoregressive_embedding = jax.random.normal(ka, (T, B, AR), jnp.float32)
    move_mask = jax.random.bernoulli(kmask, 0.8, (T, B, N))
    action_type_index = jax.random.randint(kat, (T, B), 0, 3)

    forward = jax.jit(move_head_forward)
    outs = forward(params, action_type_index, autoregressive_embedding,
                   moves, move_mask, ksamp)
    jax.block_until_ready(outs)

    move_logits, move_policy, move_index, new_ar = outs
    assert move_logits.shape == (T, B, N)
    assert move_policy.shape == (T, B, N)
    assert move_index.shape == (T, B, 1)
    assert new_ar.shape == (T, B, AR)
    assert bool(jnp.all(jnp.isfinite(move_policy)))
    assert bool(jnp.all((move_index >= 0) & (move_index < N)))
    print("KERNEL_OK")
</pallas_src>

<mosaic_0001>
module attributes {stable_mosaic.version = 11 : i64} {
  func.func @move_head_kernel(%arg0: i32, %arg1: memref<4x32x128xbf16, #tpu.memory_space<vmem>>, %arg2: memref<32x128xf32, #tpu.memory_space<vmem>>, %arg3: memref<4x128xf32, #tpu.memory_space<vmem>>, %arg4: memref<1x128xi32, #tpu.memory_space<vmem>>, %arg5: memref<1x128xf32, #tpu.memory_space<vmem>>, %arg6: memref<32x32xbf16, #tpu.memory_space<vmem>>, %arg7: memref<32x1xf32, #tpu.memory_space<vmem>>, %arg8: memref<16x32xbf16, #tpu.memory_space<vmem>>, %arg9: memref<16x1xf32, #tpu.memory_space<vmem>>, %arg10: memref<32x32xbf16, #tpu.memory_space<vmem>>, %arg11: memref<32x1xf32, #tpu.memory_space<vmem>>, %arg12: memref<16x32xbf16, #tpu.memory_space<vmem>>, %arg13: memref<16x1xf32, #tpu.memory_space<vmem>>, %arg14: memref<32x16xbf16, #tpu.memory_space<vmem>>, %arg15: memref<32x1xf32, #tpu.memory_space<vmem>>, %arg16: memref<32x32xbf16, #tpu.memory_space<vmem>>, %arg17: memref<32x1xf32, #tpu.memory_space<vmem>>, %arg18: memref<4x128xf32, #tpu.memory_space<vmem>>, %arg19: memref<4x128xf32, #tpu.memory_space<vmem>>, %arg20: memref<1x128xi32, #tpu.memory_space<vmem>>, %arg21: memref<32x128xf32, #tpu.memory_space<vmem>>) attributes {dimension_semantics = [#tpu.dimension_semantics<parallel>], iteration_bounds = array<i64: 1>, scalar_prefetch = 0 : i64, scratch_operands = 0 : i64, tpu.core_type = #tpu.core_type<tc>, window_params = [{transform_indices = @transform_0, window_bounds = array<i64: 4, 32, 128>}, {transform_indices = @transform_1, window_bounds = array<i64: 32, 128>}, {transform_indices = @transform_2, window_bounds = array<i64: 4, 128>}, {transform_indices = @transform_3, window_bounds = array<i64: 1, 128>}, {transform_indices = @transform_4, window_bounds = array<i64: 1, 128>}, {pipeline_mode = #tpu.pipeline_mode<synchronous>, transform_indices = @transform_5, window_bounds = array<i64: 32, 32>}, {pipeline_mode = #tpu.pipeline_mode<synchronous>, transform_indices = @transform_6, window_bounds = array<i64: 32, 1>}, {pipeline_mode = #tpu.pipeline_mode<synchronous>, transform_indices = @transform_7, window_bounds = array<i64: 16, 32>}, {pipeline_mode = #tpu.pipeline_mode<synchronous>, transform_indices = @transform_8, window_bounds = array<i64: 16, 1>}, {pipeline_mode = #tpu.pipeline_mode<synchronous>, transform_indices = @transform_9, window_bounds = array<i64: 32, 32>}, {pipeline_mode = #tpu.pipeline_mode<synchronous>, transform_indices = @transform_10, window_bounds = array<i64: 32, 1>}, {pipeline_mode = #tpu.pipeline_mode<synchronous>, transform_indices = @transform_11, window_bounds = array<i64: 16, 32>}, {pipeline_mode = #tpu.pipeline_mode<synchronous>, transform_indices = @transform_12, window_bounds = array<i64: 16, 1>}, {pipeline_mode = #tpu.pipeline_mode<synchronous>, transform_indices = @transform_13, window_bounds = array<i64: 32, 16>}, {pipeline_mode = #tpu.pipeline_mode<synchronous>, transform_indices = @transform_14, window_bounds = array<i64: 32, 1>}, {pipeline_mode = #tpu.pipeline_mode<synchronous>, transform_indices = @transform_15, window_bounds = array<i64: 32, 32>}, {pipeline_mode = #tpu.pipeline_mode<synchronous>, transform_indices = @transform_16, window_bounds = array<i64: 32, 1>}, {transform_indices = @transform_17, window_bounds = array<i64: 4, 128>}, {transform_indices = @transform_18, window_bounds = array<i64: 4, 128>}, {transform_indices = @transform_19, window_bounds = array<i64: 1, 128>}, {transform_indices = @transform_20, window_bounds = array<i64: 32, 128>}]} {
    %c0 = arith.constant 0 : index
    %c0_0 = arith.constant 0 : index
    %0 = vector.load %arg2[%c0, %c0_0] : memref<32x128xf32, #tpu.memory_space<vmem>>, vector<32x128xf32>
    %c0_1 = arith.constant 0 : index
    %c0_2 = arith.constant 0 : index
    %1 = vector.load %arg10[%c0_1, %c0_2] : memref<32x32xbf16, #tpu.memory_space<vmem>>, vector<32x32xbf16>
    %2 = arith.truncf %0 : vector<32x128xf32> to vector<32x128xbf16>
    %cst = arith.constant dense<0.000000e+00> : vector<32x128xf32>
    %3 = tpu.matmul %1, %2, %cst {dimension_numbers = #tpu.dot_dimension_numbers<[1], [0], [0], [1], [0, 0, 1, 1], [], []>} : vector<32x32xbf16>, vector<32x128xbf16>, vector<32x128xf32> -> vector<32x128xf32>
    %c0_3 = arith.constant 0 : index
    %c0_4 = arith.constant 0 : index
    %4 = vector.load %arg11[%c0_3, %c0_4] : memref<32x1xf32, #tpu.memory_space<vmem>>, vector<32x1xf32>
    %5 = vector.broadcast %4 : vector<32x1xf32> to vector<32x128xf32>
    %6 = arith.addf %3, %5 : vector<32x128xf32>
    %cst_5 = arith.constant 0.000000e+00 : f32
    %7 = vector.broadcast %cst_5 : f32 to vector<32x128xf32>
    %8 = arith.maximumf %6, %7 : vector<32x128xf32>
    %c0_6 = arith.constant 0 : index
    %c0_7 = arith.constant 0 : index
    %9 = vector.load %arg12[%c0_6, %c0_7] : memref<16x32xbf16, #tpu.memory_space<vmem>>, vector<16x32xbf16>
    %10 = arith.truncf %8 : vector<32x128xf32> to vector<32x128xbf16>
    %cst_8 = arith.constant dense<0.000000e+00> : vector<16x128xf32>
    %11 = tpu.matmul %9, %10, %cst_8 {dimension_numbers = #tpu.dot_dimension_numbers<[1], [0], [0], [1], [0, 0, 1, 1], [], []>} : vector<16x32xbf16>, vector<32x128xbf16>, vector<16x128xf32> -> vector<16x128xf32>
    %c0_9 = arith.constant 0 : index
    %c0_10 = arith.constant 0 : index
    %12 = vector.load %arg13[%c0_9, %c0_10] : memref<16x1xf32, #tpu.memory_space<vmem>>, vector<16x1xf32>
    %13 = vector.broadcast %12 : vector<16x1xf32> to vector<16x128xf32>
    %14 = arith.addf %11, %13 : vector<16x128xf32>
    %c0_11 = arith.constant 0 : index
    %c0_12 = arith.constant 0 : index
    %15 = vector.load %arg6[%c0_11, %c0_12] : memref<32x32xbf16, #tpu.memory_space<vmem>>, vector<32x32xbf16>
    %c0_13 = arith.constant 0 : index
    %c0_14 = arith.constant 0 : index
    %16 = vector.load %arg7[%c0_13, %c0_14] : memref<32x1xf32, #tpu.memory_space<vmem>>, vector<32x1xf32>
    %c0_15 = arith.constant 0 : index
    %c0_16 = arith.constant 0 : index
    %17 = vector.load %arg8[%c0_15, %c0_16] : memref<16x32xbf16, #tpu.memory_space<vmem>>, vector<16x32xbf16>
    %c0_17 = arith.constant 0 : index
    %c0_18 = arith.constant 0 : index
    %18 = vector.load %arg9[%c0_17, %c0_18] : memref<16x1xf32, #tpu.memory_space<vmem>>, vector<16x1xf32>
    %c0_19 = arith.constant 0 : index
    %c0_20 = arith.constant 0 : index
    %c0_21 = arith.constant 0 : index
    %19 = vector.load %arg1[%c0_19, %c0_20, %c0_21] : memref<4x32x128xbf16, #tpu.memory_space<vmem>>, vector<1x32x128xbf16>
    %20 = vector.shape_cast %19 : vector<1x32x128xbf16> to vector<32x128xbf16>
    %cst_22 = arith.constant dense<0.000000e+00> : vector<32x128xf32>
    %21 = tpu.matmul %15, %20, %cst_22 {dimension_numbers = #tpu.dot_dimension_numbers<[1], [0], [0], [1], [0, 0, 1, 1], [], []>} : vector<32x32xbf16>, vector<32x128xbf16>, vector<32x128xf32> -> vector<32x128xf32>
    %22 = vector.broadcast %16 : vector<32x1xf32> to vector<32x128xf32>
    %23 = arith.addf %21, %22 : vector<32x128xf32>
    %cst_23 = arith.constant 0.000000e+00 : f32
    %24 = vector.broadcast %cst_23 : f32 to vector<32x128xf32>
    %25 = arith.maximumf %23, %24 : vector<32x128xf32>
    %26 = arith.truncf %25 : vector<32x128xf32> to vector<32x128xbf16>
    %cst_24 = arith.constant dense<0.000000e+00> : vector<16x128xf32>
    %27 = tpu.matmul %17, %26, %cst_24 {dimension_numbers = #tpu.dot_dimension_numbers<[1], [0], [0], [1], [0, 0, 1, 1], [], []>} : vector<16x32xbf16>, vector<32x128xbf16>, vector<16x128xf32> -> vector<16x128xf32>
    %28 = vector.broadcast %18 : vector<16x1xf32> to vector<16x128xf32>
    %29 = arith.addf %27, %28 : vector<16x128xf32>
    %30 = arith.mulf %14, %29 : vector<16x128xf32>
    %cst_25 = arith.constant dense<0.000000e+00> : vector<128xf32>
    %31 = vector.multi_reduction <add>, %30, %cst_25 [0] : vector<16x128xf32> to vector<128xf32>
    %32 = vector.shape_cast %31 : vector<128xf32> to vector<1x128xf32>
    %c1 = arith.constant 1 : index
    %c0_26 = arith.constant 0 : index
    %c0_27 = arith.constant 0 : index
    %33 = vector.load %arg1[%c1, %c0_26, %c0_27] : memref<4x32x128xbf16, #tpu.memory_space<vmem>>, vector<1x32x128xbf16>
    %34 = vector.shape_cast %33 : vector<1x32x128xbf16> to vector<32x128xbf16>
    %cst_28 = arith.constant dense<0.000000e+00> : vector<32x128xf32>
    %35 = tpu.matmul %15, %34, %cst_28 {dimension_numbers = #tpu.dot_dimension_numbers<[1], [0], [0], [1], [0, 0, 1, 1], [], []>} : vector<32x32xbf16>, vector<32x128xbf16>, vector<32x128xf32> -> vector<32x128xf32>
    %36 = vector.broadcast %16 : vector<32x1xf32> to vector<32x128xf32>
    %37 = arith.addf %35, %36 : vector<32x128xf32>
    %cst_29 = arith.constant 0.000000e+00 : f32
    %38 = vector.broadcast %cst_29 : f32 to vector<32x128xf32>
    %39 = arith.maximumf %37, %38 : vector<32x128xf32>
    %40 = arith.truncf %39 : vector<32x128xf32> to vector<32x128xbf16>
    %cst_30 = arith.constant dense<0.000000e+00> : vector<16x128xf32>
    %41 = tpu.matmul %17, %40, %cst_30 {dimension_numbers = #tpu.dot_dimension_numbers<[1], [0], [0], [1], [0, 0, 1, 1], [], []>} : vector<16x32xbf16>, vector<32x128xbf16>, vector<16x128xf32> -> vector<16x128xf32>
    %42 = vector.broadcast %18 : vector<16x1xf32> to vector<16x128xf32>
    %43 = arith.addf %41, %42 : vector<16x128xf32>
    %44 = arith.mulf %14, %43 : vector<16x128xf32>
    %cst_31 = arith.constant dense<0.000000e+00> : vector<128xf32>
    %45 = vector.multi_reduction <add>, %44, %cst_31 [0] : vector<16x128xf32> to vector<128xf32>
    %46 = vector.shape_cast %45 : vector<128xf32> to vector<1x128xf32>
    %c2 = arith.constant 2 : index
    %c0_32 = arith.constant 0 : index
    %c0_33 = arith.constant 0 : index
    %47 = vector.load %arg1[%c2, %c0_32, %c0_33] : memref<4x32x128xbf16, #tpu.memory_space<vmem>>, vector<1x32x128xbf16>
    %48 = vector.shape_cast %47 : vector<1x32x128xbf16> to vector<32x128xbf16>
    %cst_34 = arith.constant dense<0.000000e+00> : vector<32x128xf32>
    %49 = tpu.matmul %15, %48, %cst_34 {dimension_numbers = #tpu.dot_dimension_numbers<[1], [0], [0], [1], [0, 0, 1, 1], [], []>} : vector<32x32xbf16>, vector<32x128xbf16>, vector<32x128xf32> -> vector<32x128xf32>
    %50 = vector.broadcast %16 : vector<32x1xf32> to vector<32x128xf32>
    %51 = arith.addf %49, %50 : vector<32x128xf32>
    %cst_35 = arith.constant 0.000000e+00 : f32
    %52 = vector.broadcast %cst_35 : f32 to vector<32x128xf32>
    %53 = arith.maximumf %51, %52 : vector<32x128xf32>
    %54 = arith.truncf %53 : vector<32x128xf32> to vector<32x128xbf16>
    %cst_36 = arith.constant dense<0.000000e+00> : vector<16x128xf32>
    %55 = tpu.matmul %17, %54, %cst_36 {dimension_numbers = #tpu.dot_dimension_numbers<[1], [0], [0], [1], [0, 0, 1, 1], [], []>} : vector<16x32xbf16>, vector<32x128xbf16>, vector<16x128xf32> -> vector<16x128xf32>
    %56 = vector.broadcast %18 : vector<16x1xf32> to vector<16x128xf32>
    %57 = arith.addf %55, %56 : vector<16x128xf32>
    %58 = arith.mulf %14, %57 : vector<16x128xf32>
    %cst_37 = arith.constant dense<0.000000e+00> : vector<128xf32>
    %59 = vector.multi_reduction <add>, %58, %cst_37 [0] : vector<16x128xf32> to vector<128xf32>
    %60 = vector.shape_cast %59 : vector<128xf32> to vector<1x128xf32>
    %c3 = arith.constant 3 : index
    %c0_38 = arith.constant 0 : index
    %c0_39 = arith.constant 0 : index
    %61 = vector.load %arg1[%c3, %c0_38, %c0_39] : memref<4x32x128xbf16, #tpu.memory_space<vmem>>, vector<1x32x128xbf16>
    %62 = vector.shape_cast %61 : vector<1x32x128xbf16> to vector<32x128xbf16>
    %cst_40 = arith.constant dense<0.000000e+00> : vector<32x128xf32>
    %63 = tpu.matmul %15, %62, %cst_40 {dimension_numbers = #tpu.dot_dimension_numbers<[1], [0], [0], [1], [0, 0, 1, 1], [], []>} : vector<32x32xbf16>, vector<32x128xbf16>, vector<32x128xf32> -> vector<32x128xf32>
    %64 = vector.broadcast %16 : vector<32x1xf32> to vector<32x128xf32>
    %65 = arith.addf %63, %64 : vector<32x128xf32>
    %cst_41 = arith.constant 0.000000e+00 : f32
    %66 = vector.broadcast %cst_41 : f32 to vector<32x128xf32>
    %67 = arith.maximumf %65, %66 : vector<32x128xf32>
    %68 = arith.truncf %67 : vector<32x128xf32> to vector<32x128xbf16>
    %cst_42 = arith.constant dense<0.000000e+00> : vector<16x128xf32>
    %69 = tpu.matmul %17, %68, %cst_42 {dimension_numbers = #tpu.dot_dimension_numbers<[1], [0], [0], [1], [0, 0, 1, 1], [], []>} : vector<16x32xbf16>, vector<32x128xbf16>, vector<16x128xf32> -> vector<16x128xf32>
    %70 = vector.broadcast %18 : vector<16x1xf32> to vector<16x128xf32>
    %71 = arith.addf %69, %70 : vector<16x128xf32>
    %72 = arith.mulf %14, %71 : vector<16x128xf32>
    %cst_43 = arith.constant dense<0.000000e+00> : vector<128xf32>
    %73 = vector.multi_reduction <add>, %72, %cst_43 [0] : vector<16x128xf32> to vector<128xf32>
    %74 = vector.shape_cast %73 : vector<128xf32> to vector<1x128xf32>
    %75 = tpu.concatenate %32, %46, %60, %74 in 0 : vector<1x128xf32>, vector<1x128xf32>, vector<1x128xf32>, vector<1x128xf32> -> vector<4x128xf32>
    %c0_44 = arith.constant 0 : index
    %c0_45 = arith.constant 0 : index
    %76 = vector.load %arg18[%c0_44, %c0_45] : memref<4x128xf32, #tpu.memory_space<vmem>>, vector<4x128xf32>
    tpu.vector_store %arg18[%c0_44, %c0_45], %75 {strides = array<i32>} : memref<4x128xf32, #tpu.memory_space<vmem>>, vector<4x128xf32>,
    %c0_46 = arith.constant 0 : index
    %c0_47 = arith.constant 0 : index
    %77 = vector.load %arg3[%c0_46, %c0_47] : memref<4x128xf32, #tpu.memory_space<vmem>>, vector<4x128xf32>
    %cst_48 = arith.constant 5.000000e-01 : f32
    %78 = vector.broadcast %cst_48 : f32 to vector<4x128xf32>
    %79 = arith.cmpf ogt, %77, %78 : vector<4x128xf32>
    %80 = arith.extui %79 : vector<4x128xi1> to vector<4x128xi32>
    %81 = arith.sitofp %80 : vector<4x128xi32> to vector<4x128xf32>
    %cst_49 = arith.constant dense<0x7F800000> : vector<128xf32>
    %82 = vector.multi_reduction <minimumf>, %75, %cst_49 [0] : vector<4x128xf32> to vector<128xf32>
    %83 = vector.shape_cast %82 : vector<128xf32> to vector<1x128xf32>
    %84 = vector.shape_cast %83 : vector<1x128xf32> to vector<1x128xf32>
    %85 = vector.broadcast %84 : vector<1x128xf32> to vector<4x128xf32>
    %86 = arith.select %79, %75, %85 : vector<4x128xi1>, vector<4x128xf32>
    %cst_50 = arith.constant dense<0xFF800000> : vector<128xf32>
    %87 = vector.multi_reduction <maximumf>, %86, %cst_50 [0] : vector<4x128xf32> to vector<128xf32>
    %88 = vector.shape_cast %87 : vector<128xf32> to vector<1x128xf32>
    %89 = vector.broadcast %88 : vector<1x128xf32> to vector<4x128xf32>
    %90 = arith.subf %86, %89 : vector<4x128xf32>
    %91 = arith.mulf %90, %81 : vector<4x128xf32>
    %92 = math.exp %91 : vector<4x128xf32>
    %cst_51 = arith.constant 0.000000e+00 : f32
    %93 = vector.broadcast %cst_51 : f32 to vector<4x128xf32>
    %94 = arith.select %79, %92, %93 : vector<4x128xi1>, vector<4x128xf32>
    %cst_52 = arith.constant dense<0.000000e+00> : vector<128xf32>
    %95 = vector.multi_reduction <add>, %94, %cst_52 [0] : vector<4x128xf32> to vector<128xf32>
    %96 = vector.shape_cast %95 : vector<128xf32> to vector<1x128xf32>
    %97 = tpu.reciprocal %96 {approx = true} : vector<1x128xf32> -> vector<1x128xf32>
    %98 = vector.broadcast %97 : vector<1x128xf32> to vector<4x128xf32>
    %99 = arith.mulf %94, %98 : vector<4x128xf32>
    %c0_53 = arith.constant 0 : index
    %c0_54 = arith.constant 0 : index
    %100 = vector.load %arg19[%c0_53, %c0_54] : memref<4x128xf32, #tpu.memory_space<vmem>>, vector<4x128xf32>
    tpu.vector_store %arg19[%c0_53, %c0_54], %99 {strides = array<i32>} : memref<4x128xf32, #tpu.memory_space<vmem>>, vector<4x128xf32>,
    %c0_55 = arith.constant 0 : index
    %c0_56 = arith.constant 0 : index
    %101 = vector.load %arg5[%c0_55, %c0_56] : memref<1x128xf32, #tpu.memory_space<vmem>>, vector<1x128xf32>
    %cst_57 = arith.constant 0.000000e+00 : f32
    %102 = vector.broadcast %cst_57 : f32 to vector<1x128xf32>
    %c0_i32 = arith.constant 0 : i32
    %103 = vector.broadcast %c0_i32 : i32 to vector<1x128xi32>
    %104 = vector.extract_strided_slice %99 {offsets = [0, 0], sizes = [1, 128], strides = [1, 1]} : vector<4x128xf32> to vector<1x128xf32>
    %105 = arith.addf %102, %104 : vector<1x128xf32>
    %106 = arith.cmpf olt, %105, %101 : vector<1x128xf32>
    %107 = arith.extui %106 : vector<1x128xi1> to vector<1x128xi32>
    %108 = arith.addi %103, %107 : vector<1x128xi32>
    %109 = vector.extract_strided_slice %99 {offsets = [1, 0], sizes = [1, 128], strides = [1, 1]} : vector<4x128xf32> to vector<1x128xf32>
    %110 = arith.addf %105, %109 : vector<1x128xf32>
    %111 = arith.cmpf olt, %110, %101 : vector<1x128xf32>
    %112 = arith.extui %111 : vector<1x128xi1> to vector<1x128xi32>
    %113 = arith.addi %108, %112 : vector<1x128xi32>
    %114 = vector.extract_strided_slice %99 {offsets = [2, 0], sizes = [1, 128], strides = [1, 1]} : vector<4x128xf32> to vector<1x128xf32>
    %115 = arith.addf %110, %114 : vector<1x128xf32>
    %116 = arith.cmpf olt, %115, %101 : vector<1x128xf32>
    %117 = arith.extui %116 : vector<1x128xi1> to vector<1x128xi32>
    %118 = arith.addi %113, %117 : vector<1x128xi32>
    %119 = vector.extract_strided_slice %99 {offsets = [3, 0], sizes = [1, 128], strides = [1, 1]} : vector<4x128xf32> to vector<1x128xf32>
    %120 = arith.addf %115, %119 : vector<1x128xf32>
    %121 = arith.cmpf olt, %120, %101 : vector<1x128xf32>
    %122 = arith.extui %121 : vector<1x128xi1> to vector<1x128xi32>
    %123 = arith.addi %118, %122 : vector<1x128xi32>
    %c3_i32 = arith.constant 3 : i32
    %124 = vector.broadcast %c3_i32 : i32 to vector<1x128xi32>
    %125 = arith.minsi %123, %124 : vector<1x128xi32>
    %c0_58 = arith.constant 0 : index
    %c0_59 = arith.constant 0 : index
    %126 = vector.load %arg20[%c0_58, %c0_59] : memref<1x128xi32, #tpu.memory_space<vmem>>, vector<1x128xi32>
    tpu.vector_store %arg20[%c0_58, %c0_59], %125 {strides = array<i32>} : memref<1x128xi32, #tpu.memory_space<vmem>>, vector<1x128xi32>,
    %cst_60 = arith.constant 0.000000e+00 : f32
    %127 = vector.broadcast %cst_60 : f32 to vector<16x128xf32>
    %c0_i32_61 = arith.constant 0 : i32
    %128 = vector.broadcast %c0_i32_61 : i32 to vector<1x128xi32>
    %129 = arith.cmpi eq, %125, %128 : vector<1x128xi32>
    %130 = arith.extui %129 : vector<1x128xi1> to vector<1x128xi32>
    %131 = arith.sitofp %130 : vector<1x128xi32> to vector<1x128xf32>
    %132 = vector.broadcast %131 : vector<1x128xf32> to vector<16x128xf32>
    %133 = arith.mulf %132, %29 : vector<16x128xf32>
    %134 = arith.addf %127, %133 : vector<16x128xf32>
    %c1_i32 = arith.constant 1 : i32
    %135 = vector.broadcast %c1_i32 : i32 to vector<1x128xi32>
    %136 = arith.cmpi eq, %125, %135 : vector<1x128xi32>
    %137 = arith.extui %136 : vector<1x128xi1> to vector<1x128xi32>
    %138 = arith.sitofp %137 : vector<1x128xi32> to vector<1x128xf32>
    %139 = vector.broadcast %138 : vector<1x128xf32> to vector<16x128xf32>
    %140 = arith.mulf %139, %43 : vector<16x128xf32>
    %141 = arith.addf %134, %140 : vector<16x128xf32>
    %c2_i32 = arith.constant 2 : i32
    %142 = vector.broadcast %c2_i32 : i32 to vector<1x128xi32>
    %143 = arith.cmpi eq, %125, %142 : vector<1x128xi32>
    %144 = arith.extui %143 : vector<1x128xi1> to vector<1x128xi32>
    %145 = arith.sitofp %144 : vector<1x128xi32> to vector<1x128xf32>
    %146 = vector.broadcast %145 : vector<1x128xf32> to vector<16x128xf32>
    %147 = arith.mulf %146, %57 : vector<16x128xf32>
    %148 = arith.addf %141, %147 : vector<16x128xf32>
    %c3_i32_62 = arith.constant 3 : i32
    %149 = vector.broadcast %c3_i32_62 : i32 to vector<1x128xi32>
    %150 = arith.cmpi eq, %125, %149 : vector<1x128xi32>
    %151 = arith.extui %150 : vector<1x128xi1> to vector<1x128xi32>
    %152 = arith.sitofp %151 : vector<1x128xi32> to vector<1x128xf32>
    %153 = vector.broadcast %152 : vector<1x128xf32> to vector<16x128xf32>
    %154 = arith.mulf %153, %71 : vector<16x128xf32>
    %155 = arith.addf %148, %154 : vector<16x128xf32>
    %c0_63 = arith.constant 0 : index
    %c0_64 = arith.constant 0 : index
    %156 = vector.load %arg14[%c0_63, %c0_64] : memref<32x16xbf16, #tpu.memory_space<vmem>>, vector<32x16xbf16>
    %157 = arith.truncf %155 : vector<16x128xf32> to vector<16x128xbf16>
    %cst_65 = arith.constant dense<0.000000e+00> : vector<32x128xf32>
    %158 = tpu.matmul %156, %157, %cst_65 {dimension_numbers = #tpu.dot_dimension_numbers<[1], [0], [0], [1], [0, 0, 1, 1], [], []>} : vector<32x16xbf16>, vector<16x128xbf16>, vector<32x128xf32> -> vector<32x128xf32>
    %c0_66 = arith.constant 0 : index
    %c0_67 = arith.constant 0 : index
    %159 = vector.load %arg15[%c0_66, %c0_67] : memref<32x1xf32, #tpu.memory_space<vmem>>, vector<32x1xf32>
    %160 = vector.broadcast %159 : vector<32x1xf32> to vector<32x128xf32>
    %161 = arith.addf %158, %160 : vector<32x128xf32>
    %cst_68 = arith.constant 0.000000e+00 : f32
    %162 = vector.broadcast %cst_68 : f32 to vector<32x128xf32>
    %163 = arith.maximumf %161, %162 : vector<32x128xf32>
    %c0_69 = arith.constant 0 : index
    %c0_70 = arith.constant 0 : index
    %164 = vector.load %arg16[%c0_69, %c0_70] : memref<32x32xbf16, #tpu.memory_space<vmem>>, vector<32x32xbf16>
    %165 = arith.truncf %163 : vector<32x128xf32> to vector<32x128xbf16>
    %cst_71 = arith.constant dense<0.000000e+00> : vector<32x128xf32>
    %166 = tpu.matmul %164, %165, %cst_71 {dimension_numbers = #tpu.dot_dimension_numbers<[1], [0], [0], [1], [0, 0, 1, 1], [], []>} : vector<32x32xbf16>, vector<32x128xbf16>, vector<32x128xf32> -> vector<32x128xf32>
    %c0_72 = arith.constant 0 : index
    %c0_73 = arith.constant 0 : index
    %167 = vector.load %arg17[%c0_72, %c0_73] : memref<32x1xf32, #tpu.memory_space<vmem>>, vector<32x1xf32>
    %168 = vector.broadcast %167 : vector<32x1xf32> to vector<32x128xf32>
    %169 = arith.addf %166, %168 : vector<32x128xf32>
    %c0_74 = arith.constant 0 : index
    %c0_75 = arith.constant 0 : index
    %170 = vector.load %arg4[%c0_74, %c0_75] : memref<1x128xi32, #tpu.memory_space<vmem>>, vector<1x128xi32>
    %c0_i32_76 = arith.constant 0 : i32
    %171 = vector.broadcast %c0_i32_76 : i32 to vector<1x128xi32>
    %172 = arith.cmpi eq, %170, %171 : vector<1x128xi32>
    %173 = arith.extui %172 : vector<1x128xi1> to vector<1x128xi32>
    %174 = arith.sitofp %173 : vector<1x128xi32> to vector<1x128xf32>
    %175 = vector.broadcast %174 : vector<1x128xf32> to vector<32x128xf32>
    %176 = arith.mulf %175, %169 : vector<32x128xf32>
    %177 = arith.addf %0, %176 : vector<32x128xf32>
    %c0_77 = arith.constant 0 : index
    %c0_78 = arith.constant 0 : index
    %178 = vector.load %arg21[%c0_77, %c0_78] : memref<32x128xf32, #tpu.memory_space<vmem>>, vector<32x128xf32>
    tpu.vector_store %arg21[%c0_77, %c0_78], %177 {strides = array<i32>} : memref<32x128xf32, #tpu.memory_space<vmem>>, vector<32x128xf32>,
    return
  }
  func.func @transform_0(%arg0: i32) -> (i32, i32, i32) {
    %c0_i32 = arith.constant 0 : i32
    %c0_i32_0 = arith.constant 0 : i32
    %c0_i32_1 = arith.constant 0 : i32
    return %c0_i32, %c0_i32_0, %arg0 : i32, i32, i32
  }
  func.func @transform_1(%arg0: i32) -> (i32, i32) {
    %c0_i32 = arith.constant 0 : i32
    %c0_i32_0 = arith.constant 0 : i32
    return %c0_i32, %arg0 : i32, i32
  }
  func.func @transform_2(%arg0: i32) -> (i32, i32) {
    %c0_i32 = arith.constant 0 : i32
    %c0_i32_0 = arith.constant 0 : i32
    return %c0_i32, %arg0 : i32, i32
  }
  func.func @transform_3(%arg0: i32) -> (i32, i32) {
    %c0_i32 = arith.constant 0 : i32
    %c0_i32_0 = arith.constant 0 : i32
    return %c0_i32, %arg0 : i32, i32
  }
  func.func @transform_4(%arg0: i32) -> (i32, i32) {
    %c0_i32 = arith.constant 0 : i32
    %c0_i32_0 = arith.constant 0 : i32
    return %c0_i32, %arg0 : i32, i32
  }
  func.func @transform_5(%arg0: i32) -> (i32, i32) {
    %c0_i32 = arith.constant 0 : i32
    %c0_i32_0 = arith.constant 0 : i32
    %c0_i32_1 = arith.constant 0 : i32
    return %c0_i32, %c0_i32_0 : i32, i32
  }
  func.func @transform_6(%arg0: i32) -> (i32, i32) {
    %c0_i32 = arith.constant 0 : i32
    %c0_i32_0 = arith.constant 0 : i32
    %c0_i32_1 = arith.constant 0 : i32
    return %c0_i32, %c0_i32_0 : i32, i32
  }
  func.func @transform_7(%arg0: i32) -> (i32, i32) {
    %c0_i32 = arith.constant 0 : i32
    %c0_i32_0 = arith.constant 0 : i32
    %c0_i32_1 = arith.constant 0 : i32
    return %c0_i32, %c0_i32_0 : i32, i32
  }
  func.func @transform_8(%arg0: i32) -> (i32, i32) {
    %c0_i32 = arith.constant 0 : i32
    %c0_i32_0 = arith.constant 0 : i32
    %c0_i32_1 = arith.constant 0 : i32
    return %c0_i32, %c0_i32_0 : i32, i32
  }
  func.func @transform_9(%arg0: i32) -> (i32, i32) {
    %c0_i32 = arith.constant 0 : i32
    %c0_i32_0 = arith.constant 0 : i32
    %c0_i32_1 = arith.constant 0 : i32
    return %c0_i32, %c0_i32_0 : i32, i32
  }
  func.func @transform_10(%arg0: i32) -> (i32, i32) {
    %c0_i32 = arith.constant 0 : i32
    %c0_i32_0 = arith.constant 0 : i32
    %c0_i32_1 = arith.constant 0 : i32
    return %c0_i32, %c0_i32_0 : i32, i32
  }
  func.func @transform_11(%arg0: i32) -> (i32, i32) {
    %c0_i32 = arith.constant 0 : i32
    %c0_i32_0 = arith.constant 0 : i32
    %c0_i32_1 = arith.constant 0 : i32
    return %c0_i32, %c0_i32_0 : i32, i32
  }
  func.func @transform_12(%arg0: i32) -> (i32, i32) {
    %c0_i32 = arith.constant 0 : i32
    %c0_i32_0 = arith.constant 0 : i32
    %c0_i32_1 = arith.constant 0 : i32
    return %c0_i32, %c0_i32_0 : i32, i32
  }
  func.func @transform_13(%arg0: i32) -> (i32, i32) {
    %c0_i32 = arith.constant 0 : i32
    %c0_i32_0 = arith.constant 0 : i32
    %c0_i32_1 = arith.constant 0 : i32
    return %c0_i32, %c0_i32_0 : i32, i32
  }
  func.func @transform_14(%arg0: i32) -> (i32, i32) {
    %c0_i32 = arith.constant 0 : i32
    %c0_i32_0 = arith.constant 0 : i32
    %c0_i32_1 = arith.constant 0 : i32
    return %c0_i32, %c0_i32_0 : i32, i32
  }
  func.func @transform_15(%arg0: i32) -> (i32, i32) {
    %c0_i32 = arith.constant 0 : i32
    %c0_i32_0 = arith.constant 0 : i32
    %c0_i32_1 = arith.constant 0 : i32
    return %c0_i32, %c0_i32_0 : i32, i32
  }
  func.func @transform_16(%arg0: i32) -> (i32, i32) {
    %c0_i32 = arith.constant 0 : i32
    %c0_i32_0 = arith.constant 0 : i32
    %c0_i32_1 = arith.constant 0 : i32
    return %c0_i32, %c0_i32_0 : i32, i32
  }
  func.func @transform_17(%arg0: i32) -> (i32, i32) {
    %c0_i32 = arith.constant 0 : i32
    %c0_i32_0 = arith.constant 0 : i32
    return %c0_i32, %arg0 : i32, i32
  }
  func.func @transform_18(%arg0: i32) -> (i32, i32) {
    %c0_i32 = arith.constant 0 : i32
    %c0_i32_0 = arith.constant 0 : i32
    return %c0_i32, %arg0 : i32, i32
  }
  func.func @transform_19(%arg0: i32) -> (i32, i32) {
    %c0_i32 = arith.constant 0 : i32
    %c0_i32_0 = arith.constant 0 : i32
    return %c0_i32, %arg0 : i32, i32
  }
  func.func @transform_20(%arg0: i32) -> (i32, i32) {
    %c0_i32 = arith.constant 0 : i32
    %c0_i32_0 = arith.constant 0 : i32
    return %c0_i32, %arg0 : i32, i32
  }
}

</mosaic_0001>

<llo_original>
// kernel: move_head_forward.1
$region0: #{move_head_forward.1}
  #allocation0 [shape = 'u32[]', space=smem, size = 0x4, offset = 0x4, fixed_abs, tag = 'smem constant byte address 0x4 - core index']
  #allocation1 [shape = 'u32[144,128]{1,0:T(1,128)}', space=vmem, size = 0x12000, scoped, tag = 'internal scratch']
  %s0 = inlined_call_operand.vmem [shape: bf16[4,32,128], index: 0, kind: input, shape index: {}]
  %s1 = inlined_call_operand.vmem [shape: f32[32,128], index: 1, kind: input, shape index: {}, may-alias: {1,20}]
  %s2 = inlined_call_operand.vmem [shape: f32[4,128], index: 2, kind: input, shape index: {}]
  %s3 = inlined_call_operand.vmem [shape: s32[1,128], index: 3, kind: input, shape index: {}]
  %s4 = inlined_call_operand.vmem [shape: f32[1,128], index: 4, kind: input, shape index: {}]
  %s5 = inlined_call_operand.vmem [shape: bf16[32,32], index: 5, kind: input, shape index: {}]
  %s6 = inlined_call_operand.vmem [shape: f32[32,1], index: 6, kind: input, shape index: {}]
  %s7 = inlined_call_operand.vmem [shape: bf16[16,32], index: 7, kind: input, shape index: {}]
  %s8 = inlined_call_operand.vmem [shape: f32[16,1], index: 8, kind: input, shape index: {}]
  %s9 = inlined_call_operand.vmem [shape: bf16[32,32], index: 9, kind: input, shape index: {}]
  %s10 = inlined_call_operand.vmem [shape: f32[32,1], index: 10, kind: input, shape index: {}]
  %s11 = inlined_call_operand.vmem [shape: bf16[16,32], index: 11, kind: input, shape index: {}]
  %s12 = inlined_call_operand.vmem [shape: f32[16,1], index: 12, kind: input, shape index: {}]
  %s13 = inlined_call_operand.vmem [shape: bf16[32,16], index: 13, kind: input, shape index: {}]
  %s14 = inlined_call_operand.vmem [shape: f32[32,1], index: 14, kind: input, shape index: {}]
  %s15 = inlined_call_operand.vmem [shape: bf16[32,32], index: 15, kind: input, shape index: {}]
  %s16 = inlined_call_operand.vmem [shape: f32[32,1], index: 16, kind: input, shape index: {}]
  %s17 = inlined_call_operand.vmem [shape: f32[4,128], index: 17, kind: output, shape index: {0}]
  %s18 = inlined_call_operand.vmem [shape: f32[4,128], index: 18, kind: output, shape index: {1}]
  %s19 = inlined_call_operand.vmem [shape: s32[1,128], index: 19, kind: output, shape index: {2}]
  %s20 = inlined_call_operand.vmem [shape: f32[32,128], index: 20, kind: output, shape index: {3}, may-alias: {1,20}]
  %21 = xla_tuple %s17, %s18, %s19, %s20
  %s22 = sld [smem:[#allocation0]]
  $region102: #{move_head_forward.1} parent=0
    _
  %s24 = ssub.s32 1, %s22
  %s25 = scalar_select 0, %s24, %s22
  // Predicated region
  $region2: #{move_head_forward.1} parent=0 // pred_check
    _
  $region3: #{move_head_forward.1} parent=0 // pred_check_branch
    %27 = sbr.rel (0) target = $region5
  $region4: #{move_head_forward.1} parent=0 // pred_region
    _
  $region5: #{move_head_forward.1} parent=0 // pred_fallthru
    _
  // Predicated region
  $region6: #{move_head_forward.1} parent=0 // pred_check
    _
  $region7: #{move_head_forward.1} parent=0 // pred_check_branch
    %29 = sbr.rel (0) target = $region9
  $region8: #{move_head_forward.1} parent=0 // pred_region
    _
  $region9: #{move_head_forward.1} parent=0 // pred_fallthru
    _
  // Predicated region
  $region10: #{move_head_forward.1} parent=0 // pred_check
    _
  $region11: #{move_head_forward.1} parent=0 // pred_check_branch
    %31 = sbr.rel (0) target = $region13
  $region12: #{move_head_forward.1} parent=0 // pred_region
    _
  $region13: #{move_head_forward.1} parent=0 // pred_fallthru
    _
  // Predicated region
  $region14: #{move_head_forward.1} parent=0 // pred_check
    _
  $region15: #{move_head_forward.1} parent=0 // pred_check_branch
    %33 = sbr.rel (0) target = $region17
  $region16: #{move_head_forward.1} parent=0 // pred_region
    _
  $region17: #{move_head_forward.1} parent=0 // pred_fallthru
    _
  // Predicated region
  $region18: #{move_head_forward.1} parent=0 // pred_check
    _
  $region19: #{move_head_forward.1} parent=0 // pred_check_branch
    %35 = sbr.rel (0) target = $region21
  $region20: #{move_head_forward.1} parent=0 // pred_region
    _
  $region21: #{move_head_forward.1} parent=0 // pred_fallthru
    _
  // Predicated region
  $region22: #{move_head_forward.1} parent=0 // pred_check
    _
  $region23: #{move_head_forward.1} parent=0 // pred_check_branch
    %37 = sbr.rel (0) target = $region25
  $region24: #{move_head_forward.1} parent=0 // pred_region
    _
  $region25: #{move_head_forward.1} parent=0 // pred_fallthru
    _
  // Predicated region
  $region26: #{move_head_forward.1} parent=0 // pred_check
    _
  $region27: #{move_head_forward.1} parent=0 // pred_check_branch
    %39 = sbr.rel (0) target = $region29
  $region28: #{move_head_forward.1} parent=0 // pred_region
    _
  $region29: #{move_head_forward.1} parent=0 // pred_fallthru
    _
  // Predicated region
  $region30: #{move_head_forward.1} parent=0 // pred_check
    _
  $region31: #{move_head_forward.1} parent=0 // pred_check_branch
    %41 = sbr.rel (0) target = $region33
  $region32: #{move_head_forward.1} parent=0 // pred_region
    _
  $region33: #{move_head_forward.1} parent=0 // pred_fallthru
    _
  // Predicated region
  $region34: #{move_head_forward.1} parent=0 // pred_check
    _
  $region35: #{move_head_forward.1} parent=0 // pred_check_branch
    %43 = sbr.rel (0) target = $region37
  $region36: #{move_head_forward.1} parent=0 // pred_region
    _
  $region37: #{move_head_forward.1} parent=0 // pred_fallthru
    _
  // Predicated region
  $region38: #{move_head_forward.1} parent=0 // pred_check
    _
  $region39: #{move_head_forward.1} parent=0 // pred_check_branch
    %45 = sbr.rel (0) target = $region41
  $region40: #{move_head_forward.1} parent=0 // pred_region
    _
  $region41: #{move_head_forward.1} parent=0 // pred_fallthru
    _
  // Predicated region
  $region42: #{move_head_forward.1} parent=0 // pred_check
    _
  $region43: #{move_head_forward.1} parent=0 // pred_check_branch
    %47 = sbr.rel (0) target = $region45
  $region44: #{move_head_forward.1} parent=0 // pred_region
    _
  $region45: #{move_head_forward.1} parent=0 // pred_fallthru
    _
  // Predicated region
  $region46: #{move_head_forward.1} parent=0 // pred_check
    _
  $region47: #{move_head_forward.1} parent=0 // pred_check_branch
    %49 = sbr.rel (0) target = $region49
  $region48: #{move_head_forward.1} parent=0 // pred_region
    _
  $region49: #{move_head_forward.1} parent=0 // pred_fallthru
    _
  // Predicated region
  $region50: #{move_head_forward.1} parent=0 // pred_check
    _
  $region51: #{move_head_forward.1} parent=0 // pred_check_branch
    %51 = sbr.rel (0) target = $region53
  $region52: #{move_head_forward.1} parent=0 // pred_region
    _
  $region53: #{move_head_forward.1} parent=0 // pred_fallthru
    _
  // Predicated region
  $region54: #{move_head_forward.1} parent=0 // pred_check
    _
  $region55: #{move_head_forward.1} parent=0 // pred_check_branch
    %53 = sbr.rel (0) target = $region57
  $region56: #{move_head_forward.1} parent=0 // pred_region
    _
  $region57: #{move_head_forward.1} parent=0 // pred_fallthru
    _
  // Predicated region
  $region58: #{move_head_forward.1} parent=0 // pred_check
    _
  $region59: #{move_head_forward.1} parent=0 // pred_check_branch
    %55 = sbr.rel (0) target = $region61
  $region60: #{move_head_forward.1} parent=0 // pred_region
    _
  $region61: #{move_head_forward.1} parent=0 // pred_fallthru
    _
  // Predicated region
  $region62: #{move_head_forward.1} parent=0 // pred_check
    _
  $region63: #{move_head_forward.1} parent=0 // pred_check_branch
    %57 = sbr.rel (0) target = $region65
  $region64: #{move_head_forward.1} parent=0 // pred_region
    _
  $region65: #{move_head_forward.1} parent=0 // pred_fallthru
    _
  // Predicated region
  $region66: #{move_head_forward.1} parent=0 // pred_check
    _
  $region67: #{move_head_forward.1} parent=0 // pred_check_branch
    %59 = sbr.rel (0) target = $region69
  $region68: #{move_head_forward.1} parent=0 // pred_region
    _
  $region69: #{move_head_forward.1} parent=0 // pred_fallthru
    _
  %v61 = vld [vmem:[%s1] sm:$0xff]
  %v62 = vld [vmem:[%s1 + $0x8] sm:$0xff]
  %v63 = vld [vmem:[%s1 + $0x10] sm:$0xff]
  %v64 = vld [vmem:[%s1 + $0x18] sm:$0xff]
  %v65 = vld [vmem:[%s9] sm:$0xf]
  %v66 = vld [vmem:[%s9 + $0x4] sm:$0xf]
  %v67 = vld [vmem:[%s9 + $0x8] sm:$0xf]
  %v68 = vld [vmem:[%s9 + $0xc] sm:$0xf]
  %v69 = vpack.c.bf16 %v62, %v61
  %v70 = vpack.c.bf16 %v64, %v63
  %v71 = vld [vmem:[%s10] sm:$0xff]
  %v72 = vld [vmem:[%s10 + $0x8] sm:$0xff]
  %v73 = vld [vmem:[%s10 + $0x10] sm:$0xff]
  %v74 = vld [vmem:[%s10 + $0x18] sm:$0xff]
  %76 = vset.pattern.permute.xlu0 0
  %77 = vperm.xlu0 %76, %v71
  %v78 = vpop.permute.xlu0 %77
  %81 = vset.pattern.permute.xlu0 0
  %82 = vperm.xlu0 %81, %v72
  %v83 = vpop.permute.xlu0 %82
  %86 = vset.pattern.permute.xlu0 0
  %87 = vperm.xlu0 %86, %v73
  %v88 = vpop.permute.xlu0 %87
  %91 = vset.pattern.permute.xlu0 0
  %92 = vperm.xlu0 %91, %v74
  %v93 = vpop.permute.xlu0 %92
  %v99 = vunpack.c.l.b16 %v65
  %v100 = vunpack.c.l.b16 %v66
  %v101 = vunpack.c.l.b16 %v67
  %v102 = vunpack.c.l.b16 %v68
  %v103 = vpack.c.b16 %v100, %v99
  %v104 = vpack.c.b16 %v102, %v101
  %vm105 = vcmask 261120
  %v107 = vsel %vm105, %v103, 0
  %v110 = vsel %vm105, %v104, 0
  %112 = vmatprep.subr.bf16.mxu0 0
  %113 = vmatpush1.bf16.msra.mxu0 %v69
  %114 = vmatprep.subr.bf16.mxu0 0
  %115 = vmatpush1.bf16.msra.mxu0 %v70
  %116 = vmatprep.subr.bf16.mxu0 0
  %117 = vmatpush1.bf16.msra.mxu0 0
  %118 = vmatprep.subr.bf16.mxu0 0
  %119 = vmatpush1.bf16.msra.mxu0 0
  %120 = vmatprep.subr.bf16.mxu0 0
  %121 = vmatpush1.bf16.msra.mxu0 0
  %122 = vmatprep.subr.bf16.mxu0 0
  %123 = vmatpush1.bf16.msra.mxu0 0
  %124 = vmatprep.subr.bf16.mxu0 0
  %125 = vmatpush1.bf16.msra.mxu0 0
  %126 = vmatprep.subr.bf16.mxu0 0
  %127 = vmatpush1.bf16.msra.mxu0 0
  %128 = vmatprep.subr.bf16.mxu0 0
  %129 = vmatpush1.bf16.msra.mxu0 0
  %130 = vmatprep.subr.bf16.mxu0 0
  %131 = vmatpush1.bf16.msra.mxu0 0
  %132 = vmatprep.subr.bf16.mxu0 0
  %133 = vmatpush1.bf16.msra.mxu0 0
  %134 = vmatprep.subr.bf16.mxu0 0
  %135 = vmatpush1.bf16.msra.mxu0 0
  %136 = vmatprep.subr.bf16.mxu0 0
  %137 = vmatpush1.bf16.msra.mxu0 0
  %138 = vmatprep.subr.bf16.mxu0 0
  %139 = vmatpush1.bf16.msra.mxu0 0
  %140 = vmatprep.subr.bf16.mxu0 0
  %141 = vmatpush1.bf16.msra.mxu0 0
  %142 = vmatprep.subr.bf16.mxu0 0
  %143 = vmatpush1.bf16.msra.mxu0 0
  %144 = vmatprep.mubr.bf16.mxu0 0
  %145 = vmatmul.mubr.bf16.gmra.mrb[0].mxu0 %v107
  %v146 = vpop.f32.mrb[0].mxu0
  %v147 = vadd.f32 %v78, %v146
  %v148 = vpop.f32.mrb[0].mxu0
  %v149 = vpop.f32.mrb[0].mxu0
  %v150 = vadd.f32 %v83, %v149
  %v151 = vpop.f32.mrb[0].mxu0
  %152 = vmatprep.mubr.bf16.mxu0 0
  %153 = vmatmul.mubr.bf16.gmra.mrb[0].mxu0 %v110
  %v154 = vpop.f32.mrb[0].mxu0
  %v155 = vadd.f32 %v88, %v154
  %v156 = vpop.f32.mrb[0].mxu0
  %v157 = vpop.f32.mrb[0].mxu0
  %v158 = vadd.f32 %v93, %v157
  %v159 = vpop.f32.mrb[0].mxu0
  %160 = vdwg.mxu0
  %v161 = vmax.f32 %v147, 0.0
  %v162 = vmax.f32 %v150, 0.0
  %v163 = vmax.f32 %v155, 0.0
  %v164 = vmax.f32 %v158, 0.0
  %v165 = vld [vmem:[%s11] sm:$0xf]
  %v166 = vld [vmem:[%s11 + $0x4] sm:$0xf]
  %v167 = vpack.c.bf16 %v162, %v161
  %v168 = vpack.c.bf16 %v164, %v163
  %v169 = vld [vmem:[%s12] sm:$0xff]
  %v170 = vld [vmem:[%s12 + $0x8] sm:$0xff]
  %172 = vset.pattern.permute.xlu0 0
  %173 = vperm.xlu0 %172, %v169
  %v174 = vpop.permute.xlu0 %173
  %177 = vset.pattern.permute.xlu0 0
  %178 = vperm.xlu0 %177, %v170
  %v179 = vpop.permute.xlu0 %178
  %v183 = vunpack.c.l.b16 %v165
  %v184 = vunpack.c.l.b16 %v166
  %v185 = vpack.c.b16 %v184, %v183
  %v187 = vsel %vm105, %v185, 0
  %189 = vmatprep.subr.bf16.mxu0 0
  %190 = vmatpush1.bf16.msra.mxu0 %v167
  %191 = vmatprep.subr.bf16.mxu0 0
  %192 = vmatpush1.bf16.msra.mxu0 %v168
  %193 = vmatprep.subr.bf16.mxu0 0
  %194 = vmatpush1.bf16.msra.mxu0 0
  %195 = vmatprep.subr.bf16.mxu0 0
  %196 = vmatpush1.bf16.msra.mxu0 0
  %197 = vmatprep.subr.bf16.mxu0 0
  %198 = vmatpush1.bf16.msra.mxu0 0
  %199 = vmatprep.subr.bf16.mxu0 0
  %200 = vmatpush1.bf16.msra.mxu0 0
  %201 = vmatprep.subr.bf16.mxu0 0
  %202 = vmatpush1.bf16.msra.mxu0 0
  %203 = vmatprep.subr.bf16.mxu0 0
  %204 = vmatpush1.bf16.msra.mxu0 0
  %205 = vmatprep.subr.bf16.mxu0 0
  %206 = vmatpush1.bf16.msra.mxu0 0
  %207 = vmatprep.subr.bf16.mxu0 0
  %208 = vmatpush1.bf16.msra.mxu0 0
  %209 = vmatprep.subr.bf16.mxu0 0
  %210 = vmatpush1.bf16.msra.mxu0 0
  %211 = vmatprep.subr.bf16.mxu0 0
  %212 = vmatpush1.bf16.msra.mxu0 0
  %213 = vmatprep.subr.bf16.mxu0 0
  %214 = vmatpush1.bf16.msra.mxu0 0
  %215 = vmatprep.subr.bf16.mxu0 0
  %216 = vmatpush1.bf16.msra.mxu0 0
  %217 = vmatprep.subr.bf16.mxu0 0
  %218 = vmatpush1.bf16.msra.mxu0 0
  %219 = vmatprep.subr.bf16.mxu0 0
  %220 = vmatpush1.bf16.msra.mxu0 0
  %221 = vmatprep.mubr.bf16.mxu0 0
  %222 = vmatmul.mubr.bf16.gmra.mrb[0].mxu0 %v187
  %v223 = vpop.f32.mrb[0].mxu0
  %v224 = vadd.f32 %v174, %v223
  %v225 = vpop.f32.mrb[0].mxu0
  %v226 = vpop.f32.mrb[0].mxu0
  %v227 = vadd.f32 %v179, %v226
  %v228 = vpop.f32.mrb[0].mxu0
  %229 = vdwg.mxu0
  %v230 = vld [vmem:[%s5] sm:$0xf]
  %v231 = vld [vmem:[%s5 + $0x4] sm:$0xf]
  %v232 = vld [vmem:[%s5 + $0x8] sm:$0xf]
  %v233 = vld [vmem:[%s5 + $0xc] sm:$0xf]
  %v234 = vld [vmem:[%s6] sm:$0xff]
  %v235 = vld [vmem:[%s6 + $0x8] sm:$0xff]
  %v236 = vld [vmem:[%s6 + $0x10] sm:$0xff]
  %v237 = vld [vmem:[%s6 + $0x18] sm:$0xff]
  %v238 = vld [vmem:[%s7] sm:$0xf]
  %v239 = vld [vmem:[%s7 + $0x4] sm:$0xf]
  %v240 = vld [vmem:[%s8] sm:$0xff]
  %v241 = vld [vmem:[%s8 + $0x8] sm:$0xff]
  %v242 = vld [vmem:[%s0] sm:$0xf]
  %v243 = vld [vmem:[%s0 + $0x4] sm:$0xf]
  %v244 = vld [vmem:[%s0 + $0x8] sm:$0xf]
  %v245 = vld [vmem:[%s0 + $0xc] sm:$0xf]
  %247 = vset.pattern.permute.xlu0 0
  %248 = vperm.xlu0 %247, %v234
  %v249 = vpop.permute.xlu0 %248
  %252 = vset.pattern.permute.xlu0 0
  %253 = vperm.xlu0 %252, %v235
  %v254 = vpop.permute.xlu0 %253
  %257 = vset.pattern.permute.xlu0 0
  %258 = vperm.xlu0 %257, %v236
  %v259 = vpop.permute.xlu0 %258
  %262 = vset.pattern.permute.xlu0 0
  %263 = vperm.xlu0 %262, %v237
  %v264 = vpop.permute.xlu0 %263
  %v270 = vunpack.c.l.b16 %v230
  %v271 = vunpack.c.l.b16 %v231
  %v272 = vunpack.c.l.b16 %v232
  %v273 = vunpack.c.l.b16 %v233
  %v274 = vpack.c.b16 %v271, %v270
  %v275 = vpack.c.b16 %v273, %v272
  %v280 = vunpack.c.l.b16 %v242
  %v281 = vunpack.c.l.b16 %v243
  %v282 = vunpack.c.l.b16 %v244
  %v283 = vunpack.c.l.b16 %v245
  %v284 = vpack.c.b16 %v281, %v280
  %v285 = vpack.c.b16 %v283, %v282
  %v289 = vsel %vm105, %v274, 0
  %v292 = vsel %vm105, %v275, 0
  %294 = vmatprep.subr.bf16.mxu0 0
  %295 = vmatpush1.bf16.msra.mxu0 %v284
  %296 = vmatprep.subr.bf16.mxu0 0
  %297 = vmatpush1.bf16.msra.mxu0 %v285
  %298 = vmatprep.subr.bf16.mxu0 0
  %299 = vmatpush1.bf16.msra.mxu0 0
  %300 = vmatprep.subr.bf16.mxu0 0
  %301 = vmatpush1.bf16.msra.mxu0 0
  %302 = vmatprep.subr.bf16.mxu0 0
  %303 = vmatpush1.bf16.msra.mxu0 0
  %304 = vmatprep.subr.bf16.mxu0 0
  %305 = vmatpush1.bf16.msra.mxu0 0
  %306 = vmatprep.subr.bf16.mxu0 0
  %307 = vmatpush1.bf16.msra.mxu0 0
  %308 = vmatprep.subr.bf16.mxu0 0
  %309 = vmatpush1.bf16.msra.mxu0 0
  %310 = vmatprep.subr.bf16.mxu0 0
  %311 = vmatpush1.bf16.msra.mxu0 0
  %312 = vmatprep.subr.bf16.mxu0 0
  %313 = vmatpush1.bf16.msra.mxu0 0
  %314 = vmatprep.subr.bf16.mxu0 0
  %315 = vmatpush1.bf16.msra.mxu0 0
  %316 = vmatprep.subr.bf16.mxu0 0
  %317 = vmatpush1.bf16.msra.mxu0 0
  %318 = vmatprep.subr.bf16.mxu0 0
  %319 = vmatpush1.bf16.msra.mxu0 0
  %320 = vmatprep.subr.bf16.mxu0 0
  %321 = vmatpush1.bf16.msra.mxu0 0
  %322 = vmatprep.subr.bf16.mxu0 0
  %323 = vmatpush1.bf16.msra.mxu0 0
  %324 = vmatprep.subr.bf16.mxu0 0
  %325 = vmatpush1.bf16.msra.mxu0 0
  %326 = vmatprep.mubr.bf16.mxu0 0
  %327 = vmatmul.mubr.bf16.gmra.mrb[0].mxu0 %v289
  %v328 = vpop.f32.mrb[0].mxu0
  %v329 = vadd.f32 %v249, %v328
  %v330 = vpop.f32.mrb[0].mxu0
  %v331 = vpop.f32.mrb[0].mxu0
  %v332 = vadd.f32 %v254, %v331
  %v333 = vpop.f32.mrb[0].mxu0
  %334 = vmatprep.mubr.bf16.mxu0 0
  %335 = vmatmul.mubr.bf16.gmra.mrb[0].mxu0 %v292
  %v336 = vpop.f32.mrb[0].mxu0
  %v337 = vadd.f32 %v259, %v336
  %v338 = vpop.f32.mrb[0].mxu0
  %v339 = vpop.f32.mrb[0].mxu0
  %v340 = vadd.f32 %v264, %v339
  %v341 = vpop.f32.mrb[0].mxu0
  %342 = vdwg.mxu0
  %v343 = vmax.f32 %v329, 0.0
  %v344 = vmax.f32 %v332, 0.0
  %v345 = vmax.f32 %v337, 0.0
  %v346 = vmax.f32 %v340, 0.0
  %v347 = vpack.c.bf16 %v344, %v343
  %v348 = vpack.c.bf16 %v346, %v345
  %350 = vset.pattern.permute.xlu0 0
  %351 = vperm.xlu0 %350, %v240
  %v352 = vpop.permute.xlu0 %351
  %355 = vset.pattern.permute.xlu0 0
  %356 = vperm.xlu0 %355, %v241
  %v357 = vpop.permute.xlu0 %356
  %v361 = vunpack.c.l.b16 %v238
  %v362 = vunpack.c.l.b16 %v239
  %v363 = vpack.c.b16 %v362, %v361
  %v365 = vsel %vm105, %v363, 0
  %367 = vmatprep.subr.bf16.mxu0 0
  %368 = vmatpush1.bf16.msra.mxu0 %v347
  %369 = vmatprep.subr.bf16.mxu0 0
  %370 = vmatpush1.bf16.msra.mxu0 %v348
  %371 = vmatprep.subr.bf16.mxu0 0
  %372 = vmatpush1.bf16.msra.mxu0 0
  %373 = vmatprep.subr.bf16.mxu0 0
  %374 = vmatpush1.bf16.msra.mxu0 0
  %375 = vmatprep.subr.bf16.mxu0 0
  %376 = vmatpush1.bf16.msra.mxu0 0
  %377 = vmatprep.subr.bf16.mxu0 0
  %378 = vmatpush1.bf16.msra.mxu0 0
  %379 = vmatprep.subr.bf16.mxu0 0
  %380 = vmatpush1.bf16.msra.mxu0 0
  %381 = vmatprep.subr.bf16.mxu0 0
  %382 = vmatpush1.bf16.msra.mxu0 0
  %383 = vmatprep.subr.bf16.mxu0 0
  %384 = vmatpush1.bf16.msra.mxu0 0
  %385 = vmatprep.subr.bf16.mxu0 0
  %386 = vmatpush1.bf16.msra.mxu0 0
  %387 = vmatprep.subr.bf16.mxu0 0
  %388 = vmatpush1.bf16.msra.mxu0 0
  %389 = vmatprep.subr.bf16.mxu0 0
  %390 = vmatpush1.bf16.msra.mxu0 0
  %391 = vmatprep.subr.bf16.mxu0 0
  %392 = vmatpush1.bf16.msra.mxu0 0
  %393 = vmatprep.subr.bf16.mxu0 0
  %394 = vmatpush1.bf16.msra.mxu0 0
  %395 = vmatprep.subr.bf16.mxu0 0
  %396 = vmatpush1.bf16.msra.mxu0 0
  %397 = vmatprep.subr.bf16.mxu0 0
  %398 = vmatpush1.bf16.msra.mxu0 0
  %399 = vmatprep.mubr.bf16.mxu0 0
  %400 = vmatmul.mubr.bf16.gmra.mrb[0].mxu0 %v365
  %v401 = vpop.f32.mrb[0].mxu0
  %v402 = vadd.f32 %v352, %v401
  %v403 = vpop.f32.mrb[0].mxu0
  %v404 = vpop.f32.mrb[0].mxu0
  %v405 = vadd.f32 %v357, %v404
  %v406 = vpop.f32.mrb[0].mxu0
  %407 = vdwg.mxu0
  %v408 = vmul.f32 %v224, %v402
  %v409 = vmul.f32 %v227, %v405
  %v410 = vadd.f32 %v408, %v409
  %v411 = vrot.slane %v410, 4
  %v412 = vadd.f32 %v410, %v411
  %v413 = vrot.slane %v412, 2
  %v414 = vadd.f32 %v412, %v413
  %v415 = vrot.slane %v414, 1
  %v416 = vadd.f32 %v414, %v415
  %s417 = scalar_lea.vmem %s0, 16
  %v418 = vld [vmem:[%s417] sm:$0xf]
  %v419 = vld [vmem:[%s417 + $0x4] sm:$0xf]
  %v420 = vld [vmem:[%s417 + $0x8] sm:$0xf]
  %v421 = vld [vmem:[%s417 + $0xc] sm:$0xf]
  %v426 = vunpack.c.l.b16 %v418
  %v427 = vunpack.c.l.b16 %v419
  %v428 = vunpack.c.l.b16 %v420
  %v429 = vunpack.c.l.b16 %v421
  %v430 = vpack.c.b16 %v427, %v426
  %v431 = vpack.c.b16 %v429, %v428
  %434 = vmatprep.subr.bf16.mxu0 0
  %435 = vmatpush1.bf16.msra.mxu0 %v430
  %436 = vmatprep.subr.bf16.mxu0 0
  %437 = vmatpush1.bf16.msra.mxu0 %v431
  %438 = vmatprep.subr.bf16.mxu0 0
  %439 = vmatpush1.bf16.msra.mxu0 0
  %440 = vmatprep.subr.bf16.mxu0 0
  %441 = vmatpush1.bf16.msra.mxu0 0
  %442 = vmatprep.subr.bf16.mxu0 0
  %443 = vmatpush1.bf16.msra.mxu0 0
  %444 = vmatprep.subr.bf16.mxu0 0
  %445 = vmatpush1.bf16.msra.mxu0 0
  %446 = vmatprep.subr.bf16.mxu0 0
  %447 = vmatpush1.bf16.msra.mxu0 0
  %448 = vmatprep.subr.bf16.mxu0 0
  %449 = vmatpush1.bf16.msra.mxu0 0
  %450 = vmatprep.subr.bf16.mxu0 0
  %451 = vmatpush1.bf16.msra.mxu0 0
  %452 = vmatprep.subr.bf16.mxu0 0
  %453 = vmatpush1.bf16.msra.mxu0 0
  %454 = vmatprep.subr.bf16.mxu0 0
  %455 = vmatpush1.bf16.msra.mxu0 0
  %456 = vmatprep.subr.bf16.mxu0 0
  %457 = vmatpush1.bf16.msra.mxu0 0
  %458 = vmatprep.subr.bf16.mxu0 0
  %459 = vmatpush1.bf16.msra.mxu0 0
  %460 = vmatprep.subr.bf16.mxu0 0
  %461 = vmatpush1.bf16.msra.mxu0 0
  %462 = vmatprep.subr.bf16.mxu0 0
  %463 = vmatpush1.bf16.msra.mxu0 0
  %464 = vmatprep.subr.bf16.mxu0 0
  %465 = vmatpush1.bf16.msra.mxu0 0
  %466 = vmatprep.mubr.bf16.mxu0 0
  %467 = vmatmul.mubr.bf16.gmra.mrb[0].mxu0 %v289
  %v468 = vpop.f32.mrb[0].mxu0
  %v469 = vadd.f32 %v249, %v468
  %v470 = vpop.f32.mrb[0].mxu0
  %v471 = vpop.f32.mrb[0].mxu0
  %v472 = vadd.f32 %v254, %v471
  %v473 = vpop.f32.mrb[0].mxu0
  %474 = vmatprep.mubr.bf16.mxu0 0
  %475 = vmatmul.mubr.bf16.gmra.mrb[0].mxu0 %v292
  %v476 = vpop.f32.mrb[0].mxu0
  %v477 = vadd.f32 %v259, %v476
  %v478 = vpop.f32.mrb[0].mxu0
  %v479 = vpop.f32.mrb[0].mxu0
  %v480 = vadd.f32 %v264, %v479
  %v481 = vpop.f32.mrb[0].mxu0
  %482 = vdwg.mxu0
  %v483 = vmax.f32 %v469, 0.0
  %v484 = vmax.f32 %v472, 0.0
  %v485 = vmax.f32 %v477, 0.0
  %v486 = vmax.f32 %v480, 0.0
  %v487 = vpack.c.bf16 %v484, %v483
  %v488 = vpack.c.bf16 %v486, %v485
  %489 = vmatprep.subr.bf16.mxu0 0
  %490 = vmatpush1.bf16.msra.mxu0 %v487
  %491 = vmatprep.subr.bf16.mxu0 0
  %492 = vmatpush1.bf16.msra.mxu0 %v488
  %493 = vmatprep.subr.bf16.mxu0 0
  %494 = vmatpush1.bf16.msra.mxu0 0
  %495 = vmatprep.subr.bf16.mxu0 0
  %496 = vmatpush1.bf16.msra.mxu0 0
  %497 = vmatprep.subr.bf16.mxu0 0
  %498 = vmatpush1.bf16.msra.mxu0 0
  %499 = vmatprep.subr.bf16.mxu0 0
  %500 = vmatpush1.bf16.msra.mxu0 0
  %501 = vmatprep.subr.bf16.mxu0 0
  %502 = vmatpush1.bf16.msra.mxu0 0
  %503 = vmatprep.subr.bf16.mxu0 0
  %504 = vmatpush1.bf16.msra.mxu0 0
  %505 = vmatprep.subr.bf16.mxu0 0
  %506 = vmatpush1.bf16.msra.mxu0 0
  %507 = vmatprep.subr.bf16.mxu0 0
  %508 = vmatpush1.bf16.msra.mxu0 0
  %509 = vmatprep.subr.bf16.mxu0 0
  %510 = vmatpush1.bf16.msra.mxu0 0
  %511 = vmatprep.subr.bf16.mxu0 0
  %512 = vmatpush1.bf16.msra.mxu0 0
  %513 = vmatprep.subr.bf16.mxu0 0
  %514 = vmatpush1.bf16.msra.mxu0 0
  %515 = vmatprep.subr.bf16.mxu0 0
  %516 = vmatpush1.bf16.msra.mxu0 0
  %517 = vmatprep.subr.bf16.mxu0 0
  %518 = vmatpush1.bf16.msra.mxu0 0
  %519 = vmatprep.subr.bf16.mxu0 0
  %520 = vmatpush1.bf16.msra.mxu0 0
  %521 = vmatprep.mubr.bf16.mxu0 0
  %522 = vmatmul.mubr.bf16.gmra.mrb[0].mxu0 %v365
  %v523 = vpop.f32.mrb[0].mxu0
  %v524 = vadd.f32 %v352, %v523
  %v525 = vpop.f32.mrb[0].mxu0
  %v526 = vpop.f32.mrb[0].mxu0
  %v527 = vadd.f32 %v357, %v526
  %v528 = vpop.f32.mrb[0].mxu0
  %529 = vdwg.mxu0
  %v530 = vmul.f32 %v224, %v524
  %v531 = vmul.f32 %v227, %v527
  %v532 = vadd.f32 %v530, %v531
  %v533 = vrot.slane %v532, 4
  %v534 = vadd.f32 %v532, %v533
  %v535 = vrot.slane %v534, 2
  %v536 = vadd.f32 %v534, %v535
  %v537 = vrot.slane %v536, 1
  %v538 = vadd.f32 %v536, %v537
  %s539 = scalar_lea.vmem %s0, 32
  %v540 = vld [vmem:[%s539] sm:$0xf]
  %v541 = vld [vmem:[%s539 + $0x4] sm:$0xf]
  %v542 = vld [vmem:[%s539 + $0x8] sm:$0xf]
  %v543 = vld [vmem:[%s539 + $0xc] sm:$0xf]
  %v548 = vunpack.c.l.b16 %v540
  %v549 = vunpack.c.l.b16 %v541
  %v550 = vunpack.c.l.b16 %v542
  %v551 = vunpack.c.l.b16 %v543
  %v552 = vpack.c.b16 %v549, %v548
  %v553 = vpack.c.b16 %v551, %v550
  %556 = vmatprep.subr.bf16.mxu0 0
  %557 = vmatpush1.bf16.msra.mxu0 %v552
  %558 = vmatprep.subr.bf16.mxu0 0
  %559 = vmatpush1.bf16.msra.mxu0 %v553
  %560 = vmatprep.subr.bf16.mxu0 0
  %561 = vmatpush1.bf16.msra.mxu0 0
  %562 = vmatprep.subr.bf16.mxu0 0
  %563 = vmatpush1.bf16.msra.mxu0 0
  %564 = vmatprep.subr.bf16.mxu0 0
  %565 = vmatpush1.bf16.msra.mxu0 0
  %566 = vmatprep.subr.bf16.mxu0 0
  %567 = vmatpush1.bf16.msra.mxu0 0
  %568 = vmatprep.subr.bf16.mxu0 0
  %569 = vmatpush1.bf16.msra.mxu0 0
  %570 = vmatprep.subr.bf16.mxu0 0
  %571 = vmatpush1.bf16.msra.mxu0 0
  %572 = vmatprep.subr.bf16.mxu0 0
  %573 = vmatpush1.bf16.msra.mxu0 0
  %574 = vmatprep.subr.bf16.mxu0 0
  %575 = vmatpush1.bf16.msra.mxu0 0
  %576 = vmatprep.subr.bf16.mxu0 0
  %577 = vmatpush1.bf16.msra.mxu0 0
  %578 = vmatprep.subr.bf16.mxu0 0
  %579 = vmatpush1.bf16.msra.mxu0 0
  %580 = vmatprep.subr.bf16.mxu0 0
  %581 = vmatpush1.bf16.msra.mxu0 0
  %582 = vmatprep.subr.bf16.mxu0 0
  %583 = vmatpush1.bf16.msra.mxu0 0
  %584 = vmatprep.subr.bf16.mxu0 0
  %585 = vmatpush1.bf16.msra.mxu0 0
  %586 = vmatprep.subr.bf16.mxu0 0
  %587 = vmatpush1.bf16.msra.mxu0 0
  %588 = vmatprep.mubr.bf16.mxu0 0
  %589 = vmatmul.mubr.bf16.gmra.mrb[0].mxu0 %v289
  %v590 = vpop.f32.mrb[0].mxu0
  %v591 = vadd.f32 %v249, %v590
  %v592 = vpop.f32.mrb[0].mxu0
  %v593 = vpop.f32.mrb[0].mxu0
  %v594 = vadd.f32 %v254, %v593
  %v595 = vpop.f32.mrb[0].mxu0
  %596 = vmatprep.mubr.bf16.mxu0 0
  %597 = vmatmul.mubr.bf16.gmra.mrb[0].mxu0 %v292
  %v598 = vpop.f32.mrb[0].mxu0
  %v599 = vadd.f32 %v259, %v598
  %v600 = vpop.f32.mrb[0].mxu0
  %v601 = vpop.f32.mrb[0].mxu0
  %v602 = vadd.f32 %v264, %v601
  %v603 = vpop.f32.mrb[0].mxu0
  %604 = vdwg.mxu0
  %v605 = vmax.f32 %v591, 0.0
  %v606 = vmax.f32 %v594, 0.0
  %v607 = vmax.f32 %v599, 0.0
  %v608 = vmax.f32 %v602, 0.0
  %v609 = vpack.c.bf16 %v606, %v605
  %v610 = vpack.c.bf16 %v608, %v607
  %611 = vmatprep.subr.bf16.mxu0 0
  %612 = vmatpush1.bf16.msra.mxu0 %v609
  %613 = vmatprep.subr.bf16.mxu0 0
  %614 = vmatpush1.bf16.msra.mxu0 %v610
  %615 = vmatprep.subr.bf16.mxu0 0
  %616 = vmatpush1.bf16.msra.mxu0 0
  %617 = vmatprep.subr.bf16.mxu0 0
  %618 = vmatpush1.bf16.msra.mxu0 0
  %619 = vmatprep.subr.bf16.mxu0 0
  %620 = vmatpush1.bf16.msra.mxu0 0
  %621 = vmatprep.subr.bf16.mxu0 0
  %622 = vmatpush1.bf16.msra.mxu0 0
  %623 = vmatprep.subr.bf16.mxu0 0
  %624 = vmatpush1.bf16.msra.mxu0 0
  %625 = vmatprep.subr.bf16.mxu0 0
  %626 = vmatpush1.bf16.msra.mxu0 0
  %627 = vmatprep.subr.bf16.mxu0 0
  %628 = vmatpush1.bf16.msra.mxu0 0
  %629 = vmatprep.subr.bf16.mxu0 0
  %630 = vmatpush1.bf16.msra.mxu0 0
  %631 = vmatprep.subr.bf16.mxu0 0
  %632 = vmatpush1.bf16.msra.mxu0 0
  %633 = vmatprep.subr.bf16.mxu0 0
  %634 = vmatpush1.bf16.msra.mxu0 0
  %635 = vmatprep.subr.bf16.mxu0 0
  %636 = vmatpush1.bf16.msra.mxu0 0
  %637 = vmatprep.subr.bf16.mxu0 0
  %638 = vmatpush1.bf16.msra.mxu0 0
  %639 = vmatprep.subr.bf16.mxu0 0
  %640 = vmatpush1.bf16.msra.mxu0 0
  %641 = vmatprep.subr.bf16.mxu0 0
  %642 = vmatpush1.bf16.msra.mxu0 0
  %643 = vmatprep.mubr.bf16.mxu0 0
  %644 = vmatmul.mubr.bf16.gmra.mrb[0].mxu0 %v365
  %v645 = vpop.f32.mrb[0].mxu0
  %v646 = vadd.f32 %v352, %v645
  %v647 = vpop.f32.mrb[0].mxu0
  %v648 = vpop.f32.mrb[0].mxu0
  %v649 = vadd.f32 %v357, %v648
  %v650 = vpop.f32.mrb[0].mxu0
  %651 = vdwg.mxu0
  %v652 = vmul.f32 %v224, %v646
  %v653 = vmul.f32 %v227, %v649
  %v654 = vadd.f32 %v652, %v653
  %v655 = vrot.slane %v654, 4
  %v656 = vadd.f32 %v654, %v655
  %v657 = vrot.slane %v656, 2
  %v658 = vadd.f32 %v656, %v657
  %v659 = vrot.slane %v658, 1
  %v660 = vadd.f32 %v658, %v659
  %s661 = scalar_lea.vmem %s0, 48
  %v662 = vld [vmem:[%s661] sm:$0xf]
  %v663 = vld [vmem:[%s661 + $0x4] sm:$0xf]
  %v664 = vld [vmem:[%s661 + $0x8] sm:$0xf]
  %v665 = vld [vmem:[%s661 + $0xc] sm:$0xf]
  %v670 = vunpack.c.l.b16 %v662
  %v671 = vunpack.c.l.b16 %v663
  %v672 = vunpack.c.l.b16 %v664
  %v673 = vunpack.c.l.b16 %v665
  %v674 = vpack.c.b16 %v671, %v670
  %v675 = vpack.c.b16 %v673, %v672
  %678 = vmatprep.subr.bf16.mxu0 0
  %679 = vmatpush1.bf16.msra.mxu0 %v674
  %680 = vmatprep.subr.bf16.mxu0 0
  %681 = vmatpush1.bf16.msra.mxu0 %v675
  %682 = vmatprep.subr.bf16.mxu0 0
  %683 = vmatpush1.bf16.msra.mxu0 0
  %684 = vmatprep.subr.bf16.mxu0 0
  %685 = vmatpush1.bf16.msra.mxu0 0
  %686 = vmatprep.subr.bf16.mxu0 0
  %687 = vmatpush1.bf16.msra.mxu0 0
  %688 = vmatprep.subr.bf16.mxu0 0
  %689 = vmatpush1.bf16.msra.mxu0 0
  %690 = vmatprep.subr.bf16.mxu0 0
  %691 = vmatpush1.bf16.msra.mxu0 0
  %692 = vmatprep.subr.bf16.mxu0 0
  %693 = vmatpush1.bf16.msra.mxu0 0
  %694 = vmatprep.subr.bf16.mxu0 0
  %695 = vmatpush1.bf16.msra.mxu0 0
  %696 = vmatprep.subr.bf16.mxu0 0
  %697 = vmatpush1.bf16.msra.mxu0 0
  %698 = vmatprep.subr.bf16.mxu0 0
  %699 = vmatpush1.bf16.msra.mxu0 0
  %700 = vmatprep.subr.bf16.mxu0 0
  %701 = vmatpush1.bf16.msra.mxu0 0
  %702 = vmatprep.subr.bf16.mxu0 0
  %703 = vmatpush1.bf16.msra.mxu0 0
  %704 = vmatprep.subr.bf16.mxu0 0
  %705 = vmatpush1.bf16.msra.mxu0 0
  %706 = vmatprep.subr.bf16.mxu0 0
  %707 = vmatpush1.bf16.msra.mxu0 0
  %708 = vmatprep.subr.bf16.mxu0 0
  %709 = vmatpush1.bf16.msra.mxu0 0
  %710 = vmatprep.mubr.bf16.mxu0 0
  %711 = vmatmul.mubr.bf16.gmra.mrb[0].mxu0 %v289
  %v712 = vpop.f32.mrb[0].mxu0
  %v713 = vadd.f32 %v249, %v712
  %v714 = vpop.f32.mrb[0].mxu0
  %v715 = vpop.f32.mrb[0].mxu0
  %v716 = vadd.f32 %v254, %v715
  %v717 = vpop.f32.mrb[0].mxu0
  %718 = vmatprep.mubr.bf16.mxu0 0
  %719 = vmatmul.mubr.bf16.gmra.mrb[0].mxu0 %v292
  %v720 = vpop.f32.mrb[0].mxu0
  %v721 = vadd.f32 %v259, %v720
  %v722 = vpop.f32.mrb[0].mxu0
  %v723 = vpop.f32.mrb[0].mxu0
  %v724 = vadd.f32 %v264, %v723
  %v725 = vpop.f32.mrb[0].mxu0
  %726 = vdwg.mxu0
  %v727 = vmax.f32 %v713, 0.0
  %v728 = vmax.f32 %v716, 0.0
  %v729 = vmax.f32 %v721, 0.0
  %v730 = vmax.f32 %v724, 0.0
  %v731 = vpack.c.bf16 %v728, %v727
  %v732 = vpack.c.bf16 %v730, %v729
  %733 = vmatprep.subr.bf16.mxu0 0
  %734 = vmatpush1.bf16.msra.mxu0 %v731
  %735 = vmatprep.subr.bf16.mxu0 0
  %736 = vmatpush1.bf16.msra.mxu0 %v732
  %737 = vmatprep.subr.bf16.mxu0 0
  %738 = vmatpush1.bf16.msra.mxu0 0
  %739 = vmatprep.subr.bf16.mxu0 0
  %740 = vmatpush1.bf16.msra.mxu0 0
  %741 = vmatprep.subr.bf16.mxu0 0
  %742 = vmatpush1.bf16.msra.mxu0 0
  %743 = vmatprep.subr.bf16.mxu0 0
  %744 = vmatpush1.bf16.msra.mxu0 0
  %745 = vmatprep.subr.bf16.mxu0 0
  %746 = vmatpush1.bf16.msra.mxu0 0
  %747 = vmatprep.subr.bf16.mxu0 0
  %748 = vmatpush1.bf16.msra.mxu0 0
  %749 = vmatprep.subr.bf16.mxu0 0
  %750 = vmatpush1.bf16.msra.mxu0 0
  %751 = vmatprep.subr.bf16.mxu0 0
  %752 = vmatpush1.bf16.msra.mxu0 0
  %753 = vmatprep.subr.bf16.mxu0 0
  %754 = vmatpush1.bf16.msra.mxu0 0
  %755 = vmatprep.subr.bf16.mxu0 0
  %756 = vmatpush1.bf16.msra.mxu0 0
  %757 = vmatprep.subr.bf16.mxu0 0
  %758 = vmatpush1.bf16.msra.mxu0 0
  %759 = vmatprep.subr.bf16.mxu0 0
  %760 = vmatpush1.bf16.msra.mxu0 0
  %761 = vmatprep.subr.bf16.mxu0 0
  %762 = vmatpush1.bf16.msra.mxu0 0
  %763 = vmatprep.subr.bf16.mxu0 0
  %764 = vmatpush1.bf16.msra.mxu0 0
  %765 = vmatprep.mubr.bf16.mxu0 0
  %766 = vmatmul.mubr.bf16.gmra.mrb[0].mxu0 %v365
  %v767 = vpop.f32.mrb[0].mxu0
  %v768 = vadd.f32 %v352, %v767
  %v769 = vpop.f32.mrb[0].mxu0
  %v770 = vpop.f32.mrb[0].mxu0
  %v771 = vadd.f32 %v357, %v770
  %v772 = vpop.f32.mrb[0].mxu0
  %773 = vdwg.mxu0
  %v774 = vmul.f32 %v224, %v768
  %v775 = vmul.f32 %v227, %v771
  %v776 = vadd.f32 %v774, %v775
  %v777 = vrot.slane %v776, 4
  %v778 = vadd.f32 %v776, %v777
  %v779 = vrot.slane %v778, 2
  %v780 = vadd.f32 %v778, %v779
  %v781 = vrot.slane %v780, 1
  %v782 = vadd.f32 %v780, %v781
  %vm783 = vcmask 1040384
  %v784 = vsel %vm783, %v416, %v538
  %vm785 = vcmask 1041408
  %v786 = vsel %vm785, %v784, %v660
  %vm787 = vcmask 1042432
  %v788 = vsel %vm787, %v786, %v782
  %789 = vst [vmem:[%s17] sm:$0xf] %v788
  %v790 = vld [vmem:[%s2] sm:$0xf]
  %vm791 = vcmp.gt.f32.partialorder %v790, 0.5
  %v792 = vsel %vm791, 1, 0
  %v793 = vcvt.s32.f32 %v792
  %vm794 = vcmask 1043456
  %v795 = vsel %vm794, %v788, inf
  %v796 = vrot.slane %v795, 4
  %v797 = vmin.f32 %v795, %v796
  %v798 = vrot.slane %v797, 2
  %v799 = vmin.f32 %v797, %v798
  %v800 = vrot.slane %v799, 1
  %v801 = vmin.f32 %v799, %v800
  %v802 = vsel %vm791, %v788, %v801
  %v803 = vsel %vm794, %v802, -inf
  %v804 = vrot.slane %v803, 4
  %v805 = vmax.f32 %v803, %v804
  %v806 = vrot.slane %v805, 2
  %v807 = vmax.f32 %v805, %v806
  %v808 = vrot.slane %v807, 1
  %v809 = vmax.f32 %v807, %v808
  %v810 = vsub.f32 %v802, %v809
  %v811 = vmul.f32 %v810, %v793
  %v812 = vmul.f32 %v811, 1.442695
  %v813 = vpow.pop %v812
  %v814 = vsel %vm791, %v813, 0.0
  %v815 = vsel %vm794, %v814, 0.0
  %v816 = vrot.slane %v815, 4
  %v817 = vadd.f32 %v815, %v816
  %v818 = vrot.slane %v817, 2
  %v819 = vadd.f32 %v817, %v818
  %v820 = vrot.slane %v819, 1
  %v821 = vadd.f32 %v819, %v820
  %v822 = vrcp.pop %v821
  %v823 = vmul.f32 %v814, %v822
  %824 = vst [vmem:[%s18] sm:$0xf] %v823
  %v825 = vld [vmem:[%s4] sm:$0x1]
  %v826 = vadd.f32 %v823, 0.0
  %vm827 = vcmp.lt.f32.partialorder %v826, %v825
  %v828 = vsel %vm827, 1, 0
  %v830 = vrot.slane %v823, 1
  %v832 = vadd.f32 %v826, %v830
  %vm833 = vcmp.lt.f32.partialorder %v832, %v825
  %v834 = vsel %vm833, 1, 0
  %v835 = vadd.s32 %v828, %v834
  %v836 = vrot.slane %v823, 2
  %v838 = vadd.f32 %v832, %v836
  %vm839 = vcmp.lt.f32.partialorder %v838, %v825
  %v840 = vsel %vm839, 1, 0
  %v841 = vadd.s32 %v835, %v840
  %v842 = vrot.slane %v823, 3
  %v844 = vadd.f32 %v838, %v842
  %vm845 = vcmp.lt.f32.partialorder %v844, %v825
  %v846 = vsel %vm845, 1, 0
  %v847 = vadd.s32 %v841, %v846
  %vm848 = vcmp.lt.s32.totalorder %v847, 3
  %v849 = vsel %vm848, %v847, 3
  %850 = vst [vmem:[%s19] sm:$0x1] %v849
  %vm851 = vcmp.eq.s32.totalorder %v849, 0
  %v852 = vsel %vm851, 1, 0
  %v853 = vcvt.s32.f32 %v852
  %v854 = vlaneseq
  %v855 = vshrl.u32 %v854, 7
  %v856 = vsub.s32 0, %v855
  %v857 = vrot.slane %v853, %v856
  %v858 = vmul.f32 %v857, %v402
  %v859 = vmul.f32 %v857, %v405
  %v860 = vadd.f32 %v858, 0.0
  %v861 = vadd.f32 %v859, 0.0
  %vm862 = vcmp.eq.s32.totalorder %v849, 1
  %v863 = vsel %vm862, 1, 0
  %v864 = vcvt.s32.f32 %v863
  %v865 = vlaneseq
  %v866 = vshrl.u32 %v865, 7
  %v867 = vsub.s32 0, %v866
  %v868 = vrot.slane %v864, %v867
  %v869 = vmul.f32 %v868, %v524
  %v870 = vmul.f32 %v868, %v527
  %v871 = vadd.f32 %v860, %v869
  %v872 = vadd.f32 %v861, %v870
  %vm873 = vcmp.eq.s32.totalorder %v849, 2
  %v874 = vsel %vm873, 1, 0
  %v875 = vcvt.s32.f32 %v874
  %v876 = vlaneseq
  %v877 = vshrl.u32 %v876, 7
  %v878 = vsub.s32 0, %v877
  %v879 = vrot.slane %v875, %v878
  %v880 = vmul.f32 %v879, %v646
  %v881 = vmul.f32 %v879, %v649
  %v882 = vadd.f32 %v871, %v880
  %v883 = vadd.f32 %v872, %v881
  %vm884 = vcmp.eq.s32.totalorder %v849, 3
  %v885 = vsel %vm884, 1, 0
  %v886 = vcvt.s32.f32 %v885
  %v887 = vlaneseq
  %v888 = vshrl.u32 %v887, 7
  %v889 = vsub.s32 0, %v888
  %v890 = vrot.slane %v886, %v889
  %v891 = vmul.f32 %v890, %v768
  %v892 = vmul.f32 %v890, %v771
  %v893 = vadd.f32 %v882, %v891
  %v894 = vadd.f32 %v883, %v892
  %v895 = vld [vmem:[%s13] sm:$0xf]
  %v896 = vld [vmem:[%s13 + $0x4] sm:$0xf]
  %v897 = vld [vmem:[%s13 + $0x8] sm:$0xf]
  %v898 = vld [vmem:[%s13 + $0xc] sm:$0xf]
  %v899 = vpack.c.bf16 %v894, %v893
  %v900 = vld [vmem:[%s14] sm:$0xff]
  %v901 = vld [vmem:[%s14 + $0x8] sm:$0xff]
  %v902 = vld [vmem:[%s14 + $0x10] sm:$0xff]
  %v903 = vld [vmem:[%s14 + $0x18] sm:$0xff]
  %905 = vset.pattern.permute.xlu0 0
  %906 = vperm.xlu0 %905, %v900
  %v907 = vpop.permute.xlu0 %906
  %910 = vset.pattern.permute.xlu0 0
  %911 = vperm.xlu0 %910, %v901
  %v912 = vpop.permute.xlu0 %911
  %915 = vset.pattern.permute.xlu0 0
  %916 = vperm.xlu0 %915, %v902
  %v917 = vpop.permute.xlu0 %916
  %920 = vset.pattern.permute.xlu0 0
  %921 = vperm.xlu0 %920, %v903
  %v922 = vpop.permute.xlu0 %921
  %v928 = vunpack.c.l.b16 %v895
  %v929 = vunpack.c.l.b16 %v896
  %v930 = vunpack.c.l.b16 %v897
  %v931 = vunpack.c.l.b16 %v898
  %v932 = vpack.c.b16 %v929, %v928
  %v933 = vpack.c.b16 %v931, %v930
  %vm934 = vcmask 130048
  %v936 = vsel %vm934, %v932, 0
  %v939 = vsel %vm934, %v933, 0
  %941 = vmatprep.subr.bf16.mxu0 0
  %942 = vmatpush1.bf16.msra.mxu0 %v899
  %943 = vmatprep.subr.bf16.mxu0 0
  %944 = vmatpush1.bf16.msra.mxu0 0
  %945 = vmatprep.subr.bf16.mxu0 0
  %946 = vmatpush1.bf16.msra.mxu0 0
  %947 = vmatprep.subr.bf16.mxu0 0
  %948 = vmatpush1.bf16.msra.mxu0 0
  %949 = vmatprep.subr.bf16.mxu0 0
  %950 = vmatpush1.bf16.msra.mxu0 0
  %951 = vmatprep.subr.bf16.mxu0 0
  %952 = vmatpush1.bf16.msra.mxu0 0
  %953 = vmatprep.subr.bf16.mxu0 0
  %954 = vmatpush1.bf16.msra.mxu0 0
  %955 = vmatprep.subr.bf16.mxu0 0
  %956 = vmatpush1.bf16.msra.mxu0 0
  %957 = vmatprep.subr.bf16.mxu0 0
  %958 = vmatpush1.bf16.msra.mxu0 0
  %959 = vmatprep.subr.bf16.mxu0 0
  %960 = vmatpush1.bf16.msra.mxu0 0
  %961 = vmatprep.subr.bf16.mxu0 0
  %962 = vmatpush1.bf16.msra.mxu0 0
  %963 = vmatprep.subr.bf16.mxu0 0
  %964 = vmatpush1.bf16.msra.mxu0 0
  %965 = vmatprep.subr.bf16.mxu0 0
  %966 = vmatpush1.bf16.msra.mxu0 0
  %967 = vmatprep.subr.bf16.mxu0 0
  %968 = vmatpush1.bf16.msra.mxu0 0
  %969 = vmatprep.subr.bf16.mxu0 0
  %970 = vmatpush1.bf16.msra.mxu0 0
  %971 = vmatprep.subr.bf16.mxu0 0
  %972 = vmatpush1.bf16.msra.mxu0 0
  %973 = vmatprep.mubr.bf16.mxu0 0
  %974 = vmatmul.mubr.bf16.gmra.mrb[0].mxu0 %v936
  %v975 = vpop.f32.mrb[0].mxu0
  %v976 = vadd.f32 %v907, %v975
  %v977 = vpop.f32.mrb[0].mxu0
  %v978 = vpop.f32.mrb[0].mxu0
  %v979 = vadd.f32 %v912, %v978
  %v980 = vpop.f32.mrb[0].mxu0
  %981 = vmatprep.mubr.bf16.mxu0 0
  %982 = vmatmul.mubr.bf16.gmra.mrb[0].mxu0 %v939
  %v983 = vpop.f32.mrb[0].mxu0
  %v984 = vadd.f32 %v917, %v983
  %v985 = vpop.f32.mrb[0].mxu0
  %v986 = vpop.f32.mrb[0].mxu0
  %v987 = vadd.f32 %v922, %v986
  %v988 = vpop.f32.mrb[0].mxu0
  %989 = vdwg.mxu0
  %v990 = vmax.f32 %v976, 0.0
  %v991 = vmax.f32 %v979, 0.0
  %v992 = vmax.f32 %v984, 0.0
  %v993 = vmax.f32 %v987, 0.0
  %v994 = vld [vmem:[%s15] sm:$0xf]
  %v995 = vld [vmem:[%s15 + $0x4] sm:$0xf]
  %v996 = vld [vmem:[%s15 + $0x8] sm:$0xf]
  %v997 = vld [vmem:[%s15 + $0xc] sm:$0xf]
  %v998 = vpack.c.bf16 %v991, %v990
  %v999 = vpack.c.bf16 %v993, %v992
  %v1000 = vld [vmem:[%s16] sm:$0xff]
  %v1001 = vld [vmem:[%s16 + $0x8] sm:$0xff]
  %v1002 = vld [vmem:[%s16 + $0x10] sm:$0xff]
  %v1003 = vld [vmem:[%s16 + $0x18] sm:$0xff]
  %1005 = vset.pattern.permute.xlu0 0
  %1006 = vperm.xlu0 %1005, %v1000
  %v1007 = vpop.permute.xlu0 %1006
  %1010 = vset.pattern.permute.xlu0 0
  %1011 = vperm.xlu0 %1010, %v1001
  %v1012 = vpop.permute.xlu0 %1011
  %1015 = vset.pattern.permute.xlu0 0
  %1016 = vperm.xlu0 %1015, %v1002
  %v1017 = vpop.permute.xlu0 %1016
  %1020 = vset.pattern.permute.xlu0 0
  %1021 = vperm.xlu0 %1020, %v1003
  %v1022 = vpop.permute.xlu0 %1021
  %v1028 = vunpack.c.l.b16 %v994
  %v1029 = vunpack.c.l.b16 %v995
  %v1030 = vunpack.c.l.b16 %v996
  %v1031 = vunpack.c.l.b16 %v997
  %v1032 = vpack.c.b16 %v1029, %v1028
  %v1033 = vpack.c.b16 %v1031, %v1030
  %v1035 = vsel %vm105, %v1032, 0
  %v1038 = vsel %vm105, %v1033, 0
  %1040 = vmatprep.subr.bf16.mxu0 0
  %1041 = vmatpush1.bf16.msra.mxu0 %v998
  %1042 = vmatprep.subr.bf16.mxu0 0
  %1043 = vmatpush1.bf16.msra.mxu0 %v999
  %1044 = vmatprep.subr.bf16.mxu0 0
  %1045 = vmatpush1.bf16.msra.mxu0 0
  %1046 = vmatprep.subr.bf16.mxu0 0
  %1047 = vmatpush1.bf16.msra.mxu0 0
  %1048 = vmatprep.subr.bf16.mxu0 0
  %1049 = vmatpush1.bf16.msra.mxu0 0
  %1050 = vmatprep.subr.bf16.mxu0 0
  %1051 = vmatpush1.bf16.msra.mxu0 0
  %1052 = vmatprep.subr.bf16.mxu0 0
  %1053 = vmatpush1.bf16.msra.mxu0 0
  %1054 = vmatprep.subr.bf16.mxu0 0
  %1055 = vmatpush1.bf16.msra.mxu0 0
  %1056 = vmatprep.subr.bf16.mxu0 0
  %1057 = vmatpush1.bf16.msra.mxu0 0
  %1058 = vmatprep.subr.bf16.mxu0 0
  %1059 = vmatpush1.bf16.msra.mxu0 0
  %1060 = vmatprep.subr.bf16.mxu0 0
  %1061 = vmatpush1.bf16.msra.mxu0 0
  %1062 = vmatprep.subr.bf16.mxu0 0
  %1063 = vmatpush1.bf16.msra.mxu0 0
  %1064 = vmatprep.subr.bf16.mxu0 0
  %1065 = vmatpush1.bf16.msra.mxu0 0
  %1066 = vmatprep.subr.bf16.mxu0 0
  %1067 = vmatpush1.bf16.msra.mxu0 0
  %1068 = vmatprep.subr.bf16.mxu0 0
  %1069 = vmatpush1.bf16.msra.mxu0 0
  %1070 = vmatprep.subr.bf16.mxu0 0
  %1071 = vmatpush1.bf16.msra.mxu0 0
  %1072 = vmatprep.mubr.bf16.mxu0 0
  %1073 = vmatmul.mubr.bf16.gmra.mrb[0].mxu0 %v1035
  %v1074 = vpop.f32.mrb[0].mxu0
  %v1075 = vadd.f32 %v1007, %v1074
  %v1076 = vpop.f32.mrb[0].mxu0
  %v1077 = vpop.f32.mrb[0].mxu0
  %v1078 = vadd.f32 %v1012, %v1077
  %v1079 = vpop.f32.mrb[0].mxu0
  %1080 = vmatprep.mubr.bf16.mxu0 0
  %1081 = vmatmul.mubr.bf16.gmra.mrb[0].mxu0 %v1038
  %v1082 = vpop.f32.mrb[0].mxu0
  %v1083 = vadd.f32 %v1017, %v1082
  %v1084 = vpop.f32.mrb[0].mxu0
  %v1085 = vpop.f32.mrb[0].mxu0
  %v1086 = vadd.f32 %v1022, %v1085
  %v1087 = vpop.f32.mrb[0].mxu0
  %1088 = vdwg.mxu0
  %v1089 = vld [vmem:[%s3] sm:$0x1]
  %vm1090 = vcmp.eq.s32.totalorder %v1089, 0
  %v1091 = vsel %vm1090, 1, 0
  %v1092 = vcvt.s32.f32 %v1091
  %v1094 = vlaneseq
  %v1095 = vshrl.u32 %v1094, 7
  %v1096 = vsub.s32 0, %v1095
  %v1097 = vrot.slane %v1092, %v1096
  %v1099 = vmul.f32 %v1097, %v1075
  %v1100 = vmul.f32 %v1097, %v1078
  %v1101 = vmul.f32 %v1097, %v1083
  %v1102 = vmul.f32 %v1097, %v1086
  %v1103 = vadd.f32 %v61, %v1099
  %v1104 = vadd.f32 %v62, %v1100
  %v1105 = vadd.f32 %v63, %v1101
  %v1106 = vadd.f32 %v64, %v1102
  %1107 = vst [vmem:[%s20] sm:$0xff] %v1103
  %1108 = vst [vmem:[%s20 + $0x8] sm:$0xff] %v1104
  %1109 = vst [vmem:[%s20 + $0x10] sm:$0xff] %v1105
  %1110 = vst [vmem:[%s20 + $0x18] sm:$0xff] %v1106
  // Predicated region
  $region70: #{move_head_forward.1} parent=0 // pred_check
    _
  $region71: #{move_head_forward.1} parent=0 // pred_check_branch
    %1112 = sbr.rel (0) target = $region73
  $region72: #{move_head_forward.1} parent=0 // pred_region
    _
  $region73: #{move_head_forward.1} parent=0 // pred_fallthru
    _
  // Predicated region
  $region74: #{move_head_forward.1} parent=0 // pred_check
    _
  $region75: #{move_head_forward.1} parent=0 // pred_check_branch
    %1114 = sbr.rel (0) target = $region77
  $region76: #{move_head_forward.1} parent=0 // pred_region
    _
  $region77: #{move_head_forward.1} parent=0 // pred_fallthru
    _
  // Predicated region
  $region78: #{move_head_forward.1} parent=0 // pred_check
    _
  $region79: #{move_head_forward.1} parent=0 // pred_check_branch
    %1116 = sbr.rel (0) target = $region81
  $region80: #{move_head_forward.1} parent=0 // pred_region
    _
  $region81: #{move_head_forward.1} parent=0 // pred_fallthru
    _
  // Predicated region
  $region82: #{move_head_forward.1} parent=0 // pred_check
    _
  $region83: #{move_head_forward.1} parent=0 // pred_check_branch
    %1118 = sbr.rel (0) target = $region85
  $region84: #{move_head_forward.1} parent=0 // pred_region
    _
  $region85: #{move_head_forward.1} parent=0 // pred_fallthru
    _
  // Predicated region
  $region86: #{move_head_forward.1} parent=0 // pred_check
    _
  $region87: #{move_head_forward.1} parent=0 // pred_check_branch
    %1120 = sbr.rel (0) target = $region89
  $region88: #{move_head_forward.1} parent=0 // pred_region
    _
  $region89: #{move_head_forward.1} parent=0 // pred_fallthru
    _
  // Predicated region
  $region90: #{move_head_forward.1} parent=0 // pred_check
    _
  $region91: #{move_head_forward.1} parent=0 // pred_check_branch
    %1122 = sbr.rel (0) target = $region93
  $region92: #{move_head_forward.1} parent=0 // pred_region
    _
  $region93: #{move_head_forward.1} parent=0 // pred_fallthru
    _
  // Predicated region
  $region94: #{move_head_forward.1} parent=0 // pred_check
    _
  $region95: #{move_head_forward.1} parent=0 // pred_check_branch
    %1124 = sbr.rel (0) target = $region97
  $region96: #{move_head_forward.1} parent=0 // pred_region
    _
  $region97: #{move_head_forward.1} parent=0 // pred_fallthru
    _
  // Predicated region
  $region98: #{move_head_forward.1} parent=0 // pred_check
    _
  $region99: #{move_head_forward.1} parent=0 // pred_check_branch
    %1126 = sbr.rel (0) target = $region101
  $region100: #{move_head_forward.1} parent=0 // pred_region
    _
  $region101: #{move_head_forward.1} parent=0 // pred_fallthru
    _

</llo_original>
